<compile_context>
chip_gen: v6e
topology: v6e:2x2x1
jax: 0.10.0
libtpu: 0.0.40
codegen_flags: <defaults>
</compile_context>

<pallas_src>
import jax
import jax.numpy as jnp
from jax.experimental import pallas as pl
from jax.experimental.pallas import tpu as pltpu

LOG_SIG_MAX = 2.0
LOG_SIG_MIN = -20.0

H1_REAL, H2_REAL = 400, 300          # logical hidden sizes (PyTorch module)
H1_PAD, H2_PAD = 512, 384            # lane-padded hidden sizes
MEAN_LANES = 128                     # mean head occupies lanes [0:128)
HEAD_PAD = 2 * MEAN_LANES            # fused head width: mean | log_std
B_TOT = H1_PAD + H2_PAD + HEAD_PAD   # packed bias buffer width (1152)


def _policy_kernel(x_ref, w1_ref, w2_ref, wh_ref, b_ref, out_ref):
    """One grid step == one option's MLP.  All blocks live fully in VMEM."""
    x = x_ref[...].astype(jnp.bfloat16)                       # (B, S)

    # 128-aligned static slices of the packed bias buffer (f32).
    b1 = b_ref[:, 0:H1_PAD]                                   # (1, 512)
    b2 = b_ref[:, H1_PAD:H1_PAD + H2_PAD]                     # (1, 384)
    bh = b_ref[:, H1_PAD + H2_PAD:B_TOT]                      # (1, 256)

    # layer 1: (B,S)@(S,512) -> f32 accumulate, bias+ReLU in f32
    h1 = jnp.dot(x, w1_ref[...], preferred_element_type=jnp.float32) + b1
    h1 = jnp.maximum(h1, 0.0)

    # layer 2: (B,512)@(512,384)
    h2 = jnp.dot(h1.astype(jnp.bfloat16), w2_ref[...],
                 preferred_element_type=jnp.float32) + b2
    h2 = jnp.maximum(h2, 0.0)

    # fused heads: (B,384)@(384,256) -> mean lanes [0:128), log_std [128:256)
    head = jnp.dot(h2.astype(jnp.bfloat16), wh_ref[...],
                   preferred_element_type=jnp.float32) + bh   # (B, 256)

    # two 128-lane-aligned (unmasked) stores into one lane-dense output slab
    out_ref[:, 0:MEAN_LANES] = head[:, 0:MEAN_LANES].astype(out_ref.dtype)
    out_ref[:, MEAN_LANES:HEAD_PAD] = jnp.clip(
        head[:, MEAN_LANES:HEAD_PAD], LOG_SIG_MIN, LOG_SIG_MAX
    ).astype(out_ref.dtype)


def gaussian_policy_forward(x, params, action_dim):
    """x: (B, state_dim) f32 -> (mean, log_std), each (B, action_dim, option_num)."""
    B, state_dim = x.shape
    opt = params["w1"].shape[0]

    out = pl.pallas_call(
        _policy_kernel,
        out_shape=jax.ShapeDtypeStruct((opt, B, HEAD_PAD), jnp.float32),
        grid=(opt,),
        in_specs=[
            # state is shared by all options (the PyTorch .repeat over options)
            pl.BlockSpec((B, state_dim), lambda o: (0, 0)),
            pl.BlockSpec((None, state_dim, H1_PAD), lambda o: (o, 0, 0)),
            pl.BlockSpec((None, H1_PAD, H2_PAD), lambda o: (o, 0, 0)),
            pl.BlockSpec((None, H2_PAD, HEAD_PAD), lambda o: (o, 0, 0)),
            pl.BlockSpec((None, 1, B_TOT), lambda o: (o, 0, 0)),
        ],
        out_specs=pl.BlockSpec((None, B, HEAD_PAD), lambda o: (o, 0, 0)),
        compiler_params=pltpu.CompilerParams(
            # options are independent -> dual-TC on v7x, harmless on v5e/v6e
            dimension_semantics=("parallel",)),
    )(x, params["w1"], params["w2"], params["wh"], params["b"])

    # out: (opt, B, 256). Split the fused head and match PyTorch's
    # (batch, action_dim, option_num) layout.
    mean = jnp.transpose(out[:, :, 0:action_dim], (1, 2, 0))
    log_std = jnp.transpose(
        out[:, :, MEAN_LANES:MEAN_LANES + action_dim], (1, 2, 0))
    return mean, log_std


def _xavier_uniform(key, shape):
    # xavier_uniform_ with gain=1, weight stored as (fan_in, fan_out)
    bound = jnp.sqrt(6.0 / (shape[0] + shape[1]))
    return jax.random.uniform(key, shape, jnp.float32, -bound, bound)


def init_policy_params(key, state_dim, action_dim, option_num=3):
    """Packed, padded, per-option parameters for the Pallas kernel.

    w1: (opt, state_dim, 512) bf16   (400 padded to 512 with zeros)
    w2: (opt, 512, 384)       bf16   (rows 400->512 and cols 300->384 zero)
    wh: (opt, 384, 256)       bf16   mean head in lanes [0:A), log_std in [128:128+A)
    b : (opt, 1, 1152)        f32    [ b1(512) | b2(384) | bhead(256) ]
    """
    assert action_dim <= MEAN_LANES
    w1 = jnp.zeros((option_num, state_dim, H1_PAD), jnp.float32)
    w2 = jnp.zeros((option_num, H1_PAD, H2_PAD), jnp.float32)
    wh = jnp.zeros((option_num, H2_PAD, HEAD_PAD), jnp.float32)
    b = jnp.zeros((option_num, 1, B_TOT), jnp.float32)

    for g in range(option_num):
        key, k1, k2, km, ks, kb1, kb2, kbm, kbs = jax.random.split(key, 9)
        w1g = _xavier_uniform(k1, (state_dim, H1_REAL))
        w2g = _xavier_uniform(k2, (H1_REAL, H2_REAL))
        wmg = _xavier_uniform(km, (H2_REAL, action_dim))
        wsg = _xavier_uniform(ks, (H2_REAL, action_dim))
        # PyTorch's weights_init_ zeroes biases; small random biases are used
        # here so the fused bias path is actually exercised by the check.
        b1g = jax.random.uniform(kb1, (H1_REAL,), jnp.float32, -0.05, 0.05)
        b2g = jax.random.uniform(kb2, (H2_REAL,), jnp.float32, -0.05, 0.05)
        bmg = jax.random.uniform(kbm, (action_dim,), jnp.float32, -0.05, 0.05)
        bsg = jax.random.uniform(kbs, (action_dim,), jnp.float32, -0.05, 0.05)

        w1 = w1.at[g, :, :H1_REAL].set(w1g)
        w2 = w2.at[g, :H1_REAL, :H2_REAL].set(w2g)
        wh = wh.at[g, :H2_REAL, 0:action_dim].set(wmg)
        wh = wh.at[g, :H2_REAL, MEAN_LANES:MEAN_LANES + action_dim].set(wsg)
        b = b.at[g, 0, 0:H1_REAL].set(b1g)
        b = b.at[g, 0, H1_PAD:H1_PAD + H2_REAL].set(b2g)
        b = b.at[g, 0, H1_PAD + H2_PAD:H1_PAD + H2_PAD + action_dim].set(bmg)
        b = b.at[g, 0, H1_PAD + H2_PAD + MEAN_LANES:
                 H1_PAD + H2_PAD + MEAN_LANES + action_dim].set(bsg)

    return {"w1": w1.astype(jnp.bfloat16),
            "w2": w2.astype(jnp.bfloat16),
            "wh": wh.astype(jnp.bfloat16),
            "b": b}


def _reference_forward(x, params, action_dim):
    """Pure-JAX reference using the same packed bf16 weights / f32 math."""
    hp = jax.lax.Precision.HIGHEST
    w1 = params["w1"].astype(jnp.float32)
    w2 = params["w2"].astype(jnp.float32)
    wh = params["wh"].astype(jnp.float32)
    b = params["b"]
    b1 = b[:, :, 0:H1_PAD]
    b2 = b[:, :, H1_PAD:H1_PAD + H2_PAD]
    bh = b[:, :, H1_PAD + H2_PAD:B_TOT]

    xb = x.astype(jnp.bfloat16).astype(jnp.float32)
    h1 = jnp.maximum(jnp.einsum("bs,osh->obh", xb, w1, precision=hp) + b1, 0.0)
    h1b = h1.astype(jnp.bfloat16).astype(jnp.float32)
    h2 = jnp.maximum(jnp.einsum("obh,ohk->obk", h1b, w2, precision=hp) + b2, 0.0)
    h2b = h2.astype(jnp.bfloat16).astype(jnp.float32)
    head = jnp.einsum("obk,okm->obm", h2b, wh, precision=hp) + bh  # (opt,B,256)

    mean = jnp.transpose(head[:, :, 0:action_dim], (1, 2, 0))
    log_std = jnp.transpose(
        jnp.clip(head[:, :, MEAN_LANES:MEAN_LANES + action_dim],
                 LOG_SIG_MIN, LOG_SIG_MAX), (1, 2, 0))
    return mean, log_std


# TODO(synk): the stochastic `sample()` method (Normal.rsample, tanh squash,
# log_prob correction) is not part of forward() and is left to plain JAX.

if __name__ == "__main__":
    state_dim, action_dim, option_num, batch = 24, 6, 3, 8

    key = jax.random.PRNGKey(0)
    key, kx = jax.random.split(key)
    x = jax.random.normal(kx, (batch, state_dim), jnp.float32)
    params = init_policy_params(key, state_dim, action_dim, option_num)

    fwd = jax.jit(gaussian_policy_forward, static_argnames=("action_dim",))
    mean, log_std = fwd(x, params, action_dim=action_dim)
    jax.block_until_ready((mean, log_std))

    r_mean, r_log_std = _reference_forward(x, params, action_dim)

    assert mean.shape == (batch, action_dim, option_num)
    assert log_std.shape == (batch, action_dim, option_num)
    assert jnp.allclose(mean, r_mean, atol=2e-3, rtol=2e-3)
    assert jnp.allclose(log_std, r_log_std, atol=2e-3, rtol=2e-3)
    assert bool(jnp.all(log_std <= LOG_SIG_MAX))
    assert bool(jnp.all(log_std >= LOG_SIG_MIN))

    print("KERNEL_OK")
</pallas_src>

<mosaic_0001>
module attributes {stable_mosaic.version = 11 : i64} {
  func.func @_policy_kernel(%arg0: i32, %arg1: memref<8x24xf32, #tpu.memory_space<vmem>>, %arg2: memref<1x24x512xbf16, #tpu.memory_space<vmem>>, %arg3: memref<1x512x384xbf16, #tpu.memory_space<vmem>>, %arg4: memref<1x384x256xbf16, #tpu.memory_space<vmem>>, %arg5: memref<1x1x1152xf32, #tpu.memory_space<vmem>>, %arg6: memref<1x8x256xf32, #tpu.memory_space<vmem>>) attributes {dimension_semantics = [#tpu.dimension_semantics<parallel>], iteration_bounds = array<i64: 3>, scalar_prefetch = 0 : i64, scratch_operands = 0 : i64, tpu.core_type = #tpu.core_type<tc>, window_params = [{pipeline_mode = #tpu.pipeline_mode<synchronous>, transform_indices = @transform_0, window_bounds = array<i64: 8, 24>}, {transform_indices = @transform_1, window_bounds = array<i64: 1, 24, 512>}, {transform_indices = @transform_2, window_bounds = array<i64: 1, 512, 384>}, {transform_indices = @transform_3, window_bounds = array<i64: 1, 384, 256>}, {transform_indices = @transform_4, window_bounds = array<i64: 1, 1, 1152>}, {transform_indices = @transform_5, window_bounds = array<i64: 1, 8, 256>}]} {
    %c0 = arith.constant 0 : index
    %c0_0 = arith.constant 0 : index
    %0 = vector.load %arg1[%c0, %c0_0] : memref<8x24xf32, #tpu.memory_space<vmem>>, vector<8x24xf32>
    %1 = arith.truncf %0 : vector<8x24xf32> to vector<8x24xbf16>
    %c0_1 = arith.constant 0 : index
    %c0_2 = arith.constant 0 : index
    %c0_3 = arith.constant 0 : index
    %2 = vector.load %arg5[%c0_1, %c0_2, %c0_3] : memref<1x1x1152xf32, #tpu.memory_space<vmem>>, vector<1x1x512xf32>
    %3 = vector.shape_cast %2 : vector<1x1x512xf32> to vector<1x512xf32>
    %c0_4 = arith.constant 0 : index
    %c0_5 = arith.constant 0 : index
    %c512 = arith.constant 512 : index
    %4 = vector.load %arg5[%c0_4, %c0_5, %c512] : memref<1x1x1152xf32, #tpu.memory_space<vmem>>, vector<1x1x384xf32>
    %5 = vector.shape_cast %4 : vector<1x1x384xf32> to vector<1x384xf32>
    %c0_6 = arith.constant 0 : index
    %c0_7 = arith.constant 0 : index
    %c896 = arith.constant 896 : index
    %6 = vector.load %arg5[%c0_6, %c0_7, %c896] : memref<1x1x1152xf32, #tpu.memory_space<vmem>>, vector<1x1x256xf32>
    %7 = vector.shape_cast %6 : vector<1x1x256xf32> to vector<1x256xf32>
    %c0_8 = arith.constant 0 : index
    %c0_9 = arith.constant 0 : index
    %c0_10 = arith.constant 0 : index
    %8 = vector.load %arg2[%c0_8, %c0_9, %c0_10] : memref<1x24x512xbf16, #tpu.memory_space<vmem>>, vector<1x24x512xbf16>
    %9 = vector.shape_cast %8 : vector<1x24x512xbf16> to vector<24x512xbf16>
    %cst = arith.constant dense<0.000000e+00> : vector<8x512xf32>
    %10 = tpu.matmul %1, %9, %cst {dimension_numbers = #tpu.dot_dimension_numbers<[1], [0], [0], [1], [0, 0, 1, 1], [], []>} : vector<8x24xbf16>, vector<24x512xbf16>, vector<8x512xf32> -> vector<8x512xf32>
    %11 = vector.broadcast %3 : vector<1x512xf32> to vector<8x512xf32>
    %12 = arith.addf %10, %11 : vector<8x512xf32>
    %cst_11 = arith.constant 0.000000e+00 : f32
    %13 = vector.broadcast %cst_11 : f32 to vector<8x512xf32>
    %14 = arith.maximumf %12, %13 : vector<8x512xf32>
    %15 = arith.truncf %14 : vector<8x512xf32> to vector<8x512xbf16>
    %c0_12 = arith.constant 0 : index
    %c0_13 = arith.constant 0 : index
    %c0_14 = arith.constant 0 : index
    %16 = vector.load %arg3[%c0_12, %c0_13, %c0_14] : memref<1x512x384xbf16, #tpu.memory_space<vmem>>, vector<1x512x384xbf16>
    %17 = vector.shape_cast %16 : vector<1x512x384xbf16> to vector<512x384xbf16>
    %cst_15 = arith.constant dense<0.000000e+00> : vector<8x384xf32>
    %18 = tpu.matmul %15, %17, %cst_15 {dimension_numbers = #tpu.dot_dimension_numbers<[1], [0], [0], [1], [0, 0, 1, 1], [], []>} : vector<8x512xbf16>, vector<512x384xbf16>, vector<8x384xf32> -> vector<8x384xf32>
    %19 = vector.broadcast %5 : vector<1x384xf32> to vector<8x384xf32>
    %20 = arith.addf %18, %19 : vector<8x384xf32>
    %cst_16 = arith.constant 0.000000e+00 : f32
    %21 = vector.broadcast %cst_16 : f32 to vector<8x384xf32>
    %22 = arith.maximumf %20, %21 : vector<8x384xf32>
    %23 = arith.truncf %22 : vector<8x384xf32> to vector<8x384xbf16>
    %c0_17 = arith.constant 0 : index
    %c0_18 = arith.constant 0 : index
    %c0_19 = arith.constant 0 : index
    %24 = vector.load %arg4[%c0_17, %c0_18, %c0_19] : memref<1x384x256xbf16, #tpu.memory_space<vmem>>, vector<1x384x256xbf16>
    %25 = vector.shape_cast %24 : vector<1x384x256xbf16> to vector<384x256xbf16>
    %cst_20 = arith.constant dense<0.000000e+00> : vector<8x256xf32>
    %26 = tpu.matmul %23, %25, %cst_20 {dimension_numbers = #tpu.dot_dimension_numbers<[1], [0], [0], [1], [0, 0, 1, 1], [], []>} : vector<8x384xbf16>, vector<384x256xbf16>, vector<8x256xf32> -> vector<8x256xf32>
    %27 = vector.broadcast %7 : vector<1x256xf32> to vector<8x256xf32>
    %28 = arith.addf %26, %27 : vector<8x256xf32>
    %29 = vector.extract_strided_slice %28 {offsets = [0, 0], sizes = [8, 128], strides = [1, 1]} : vector<8x256xf32> to vector<8x128xf32>
    %c0_21 = arith.constant 0 : index
    %c0_22 = arith.constant 0 : index
    %c0_23 = arith.constant 0 : index
    %30 = vector.load %arg6[%c0_21, %c0_22, %c0_23] : memref<1x8x256xf32, #tpu.memory_space<vmem>>, vector<1x8x128xf32>
    %31 = vector.shape_cast %30 : vector<1x8x128xf32> to vector<8x128xf32>
    %32 = vector.shape_cast %29 : vector<8x128xf32> to vector<1x8x128xf32>
    tpu.vector_store %arg6[%c0_21, %c0_22, %c0_23], %32 {strides = array<i32>} : memref<1x8x256xf32, #tpu.memory_space<vmem>>, vector<1x8x128xf32>,
    %33 = vector.extract_strided_slice %28 {offsets = [0, 128], sizes = [8, 128], strides = [1, 1]} : vector<8x256xf32> to vector<8x128xf32>
    %cst_24 = arith.constant -2.000000e+01 : f32
    %cst_25 = arith.constant 2.000000e+00 : f32
    %34 = vector.broadcast %cst_24 : f32 to vector<8x128xf32>
    %35 = arith.maximumf %34, %33 : vector<8x128xf32>
    %36 = vector.broadcast %cst_25 : f32 to vector<8x128xf32>
    %37 = arith.minimumf %36, %35 : vector<8x128xf32>
    %c0_26 = arith.constant 0 : index
    %c0_27 = arith.constant 0 : index
    %c128 = arith.constant 128 : index
    %38 = vector.load %arg6[%c0_26, %c0_27, %c128] : memref<1x8x256xf32, #tpu.memory_space<vmem>>, vector<1x8x128xf32>
    %39 = vector.shape_cast %38 : vector<1x8x128xf32> to vector<8x128xf32>
    %40 = vector.shape_cast %37 : vector<8x128xf32> to vector<1x8x128xf32>
    tpu.vector_store %arg6[%c0_26, %c0_27, %c128], %40 {strides = array<i32>} : memref<1x8x256xf32, #tpu.memory_space<vmem>>, vector<1x8x128xf32>,
    return
  }
  func.func @transform_0(%arg0: i32) -> (i32, i32) {
    %c0_i32 = arith.constant 0 : i32
    %c0_i32_0 = arith.constant 0 : i32
    %c0_i32_1 = arith.constant 0 : i32
    return %c0_i32, %c0_i32_0 : i32, i32
  }
  func.func @transform_1(%arg0: i32) -> (i32, i32, i32) {
    %c0_i32 = arith.constant 0 : i32
    %c0_i32_0 = arith.constant 0 : i32
    %c0_i32_1 = arith.constant 0 : i32
    return %arg0, %c0_i32, %c0_i32_0 : i32, i32, i32
  }
  func.func @transform_2(%arg0: i32) -> (i32, i32, i32) {
    %c0_i32 = arith.constant 0 : i32
    %c0_i32_0 = arith.constant 0 : i32
    %c0_i32_1 = arith.constant 0 : i32
    return %arg0, %c0_i32, %c0_i32_0 : i32, i32, i32
  }
  func.func @transform_3(%arg0: i32) -> (i32, i32, i32) {
    %c0_i32 = arith.constant 0 : i32
    %c0_i32_0 = arith.constant 0 : i32
    %c0_i32_1 = arith.constant 0 : i32
    return %arg0, %c0_i32, %c0_i32_0 : i32, i32, i32
  }
  func.func @transform_4(%arg0: i32) -> (i32, i32, i32) {
    %c0_i32 = arith.constant 0 : i32
    %c0_i32_0 = arith.constant 0 : i32
    %c0_i32_1 = arith.constant 0 : i32
    return %arg0, %c0_i32, %c0_i32_0 : i32, i32, i32
  }
  func.func @transform_5(%arg0: i32) -> (i32, i32, i32) {
    %c0_i32 = arith.constant 0 : i32
    %c0_i32_0 = arith.constant 0 : i32
    %c0_i32_1 = arith.constant 0 : i32
    return %arg0, %c0_i32, %c0_i32_0 : i32, i32, i32
  }
}

</mosaic_0001>

<llo_original>
// kernel: gaussian_policy_forward.1
$region0: #{gaussian_policy_forward.1}
  #allocation0 [shape = 'u32[]', space=smem, size = 0x4, offset = 0x4, fixed_abs, tag = 'smem constant byte address 0x4 - core index']
  #allocation1 [shape = 'u32[144,128]{1,0:T(1,128)}', space=vmem, size = 0x12000, scoped, tag = 'internal scratch']
  %s0 = inlined_call_operand.hbm [shape: f32[8,24], index: 0, kind: input, shape index: {}]
  %s1 = inlined_call_operand.hbm [shape: bf16[3,24,512], index: 1, kind: input, shape index: {}]
  %s2 = inlined_call_operand.hbm [shape: bf16[3,512,384], index: 2, kind: input, shape index: {}]
  %s3 = inlined_call_operand.hbm [shape: bf16[3,384,256], index: 3, kind: input, shape index: {}]
  %s4 = inlined_call_operand.hbm [shape: f32[3,1,1152], index: 4, kind: input, shape index: {}]
  %s5 = inlined_call_operand.vmem [shape: f32[3,8,256], index: 5, kind: output, shape index: {}]
  %s6 = sld [smem:[#allocation0]]
  $region73: #{gaussian_policy_forward.1} parent=0
    _
  %s8 = ssub.s32 1, %s6
  %s9 = scalar_select 0, %s8, %s6
  $region1: #{gaussian_policy_forward.1} parent=0
    #allocation2 [shape = 'u8[4096]{0}', space=vmem, size = 0x1000, scoped, tag = 'input window, operand 0, single buffered']
    #allocation3 [shape = 's32[2]{0}', space=sflag, size = 0x8, scoped, tag = 'scoped memory for gaussian_policy_forward.1']
    #allocation4 [shape = 'u8[49152]{0}', space=vmem, size = 0xc000, scoped, tag = 'input window, operand 1']
    #allocation5 [shape = 's32[2]{0}', space=sflag, size = 0x8, scoped, tag = 'scoped memory for gaussian_policy_forward.1']
    #allocation6 [shape = 'u8[786432]{0}', space=vmem, size = 0xc0000, scoped, tag = 'input window, operand 2']
    #allocation7 [shape = 'u8[393216]{0}', space=vmem, size = 0x60000, scoped, tag = 'input window, operand 3']
    #allocation8 [shape = 's32[2]{0}', space=sflag, size = 0x8, scoped, tag = 'scoped memory for gaussian_policy_forward.1']
    #allocation9 [shape = 'u8[9216]{0}', space=vmem, size = 0x2400, scoped, tag = 'input window, operand 4']
    %10 = vsyncpa [#allocation3], 0
    %11 = vsyncpa [#allocation5], 0
    %s12 = scalar_lea.sflag [#allocation5], 1
    %13 = vsyncpa %s12, 0
    %14 = vsyncpa [#allocation8], 0
    %s15 = scalar_lea.sflag [#allocation8], 1
    %16 = vsyncpa %s15, 0
    loop: start=0, step=1, limit=5
    $region2: #{gaussian_policy_forward.1} parent=1 // loop_pre_header
      _
    $region3: #{gaussian_policy_forward.1} parent=1 // loop_header
      %s18 = sphi 0, %s22
      %p19 = scmp.ge.s32.totalorder %s18, 5
      %s26 = sphi 0, %s26
      %s28 = sphi 0, %s26
      %s29 = sphi 0, %s28
      %s43 = sphi 0, %s29
      %s49 = sphi 0, %s51
      %s52 = sphi 0, %s49
      %s53 = sphi 0, %s52
      %s69 = sphi 0, %s53
      %s75 = sphi 0, %s77
      %s78 = sphi 0, %s75
      %s79 = sphi 0, %s78
      %s95 = sphi 0, %s79
      %s101 = sphi 0, %s103
      %s104 = sphi 0, %s101
      %s105 = sphi 0, %s104
      %s121 = sphi 0, %s105
      %s127 = sphi 0, %s129
      %s130 = sphi 0, %s127
      %s131 = sphi 0, %s130
      %s147 = sphi 0, %s131
      %s153 = sphi 0, %s155
      %s156 = sphi 0, %s153
      %s157 = sphi 0, %s156
      %s173 = sphi 0, %s157
    $region4: #{gaussian_policy_forward.1} parent=1 // loop_header_branch
      %21 = sbr.rel (%p19) target = $region8
    $region5: #{gaussian_policy_forward.1} parent=1 // loop_body
      %s23 = ssub.s32 %s18, 1
      %s24 = ssub.s32 %s18, 2
      %s25 = sadd.s32 %s18, 1
      %s27 = sadd.s32 %s26, 1
      %p30 = scmp.eq.s32.totalorder %s18, 2
      %p31 = scmp.ne.s32.totalorder %s26, %s28
      %p32 = scmp.eq.s32.totalorder %s18, 0
      %p33 = por %p31, %p32
      %p34 = scmp.ne.s32.totalorder %s26, %s28
      %p35 = scmp.eq.s32.totalorder %s23, 2
      %p36 = por %p34, %p35
      %p37 = scmp.ne.s32.totalorder %s28, %s29
      %p38 = scmp.eq.s32.totalorder %s23, 0
      %p39 = por %p37, %p38
      %p40 = scmp.ne.s32.totalorder %s28, %s29
      %p41 = scmp.eq.s32.totalorder %s24, 2
      %p42 = por %p40, %p41
      %p44 = scmp.ne.s32.totalorder %s29, %s43
      %p45 = scmp.eq.s32.totalorder %s24, 0
      %p46 = por %p44, %p45
      %s47 = ssub.s32 %s18, %s25
      %p48 = scmp.eq.s32.totalorder %s47, 0
      %s50 = sadd.s32 %s49, 1
      %s51 = scalar_select %p48, %s49, %s50
      %p54 = pneg %p48
      %p55 = scmp.eq.s32.totalorder %s18, 2
      %p56 = por %p54, %p55
      %p57 = scmp.ne.s32.totalorder %s49, %s52
      %p58 = scmp.eq.s32.totalorder %s18, 0
      %p59 = por %p57, %p58
      %p60 = scmp.ne.s32.totalorder %s49, %s52
      %p61 = scmp.eq.s32.totalorder %s23, 2
      %p62 = por %p60, %p61
      %p63 = scmp.ne.s32.totalorder %s52, %s53
      %p64 = scmp.eq.s32.totalorder %s23, 0
      %p65 = por %p63, %p64
      %p66 = scmp.ne.s32.totalorder %s52, %s53
      %p67 = scmp.eq.s32.totalorder %s24, 2
      %p68 = por %p66, %p67
      %p70 = scmp.ne.s32.totalorder %s53, %s69
      %p71 = scmp.eq.s32.totalorder %s24, 0
      %p72 = por %p70, %p71
      %s73 = ssub.s32 %s18, %s25
      %p74 = scmp.eq.s32.totalorder %s73, 0
      %s76 = sadd.s32 %s75, 1
      %s77 = scalar_select %p74, %s75, %s76
      %p80 = pneg %p74
      %p81 = scmp.eq.s32.totalorder %s18, 2
      %p82 = por %p80, %p81
      %p83 = scmp.ne.s32.totalorder %s75, %s78
      %p84 = scmp.eq.s32.totalorder %s18, 0
      %p85 = por %p83, %p84
      %p86 = scmp.ne.s32.totalorder %s75, %s78
      %p87 = scmp.eq.s32.totalorder %s23, 2
      %p88 = por %p86, %p87
      %p89 = scmp.ne.s32.totalorder %s78, %s79
      %p90 = scmp.eq.s32.totalorder %s23, 0
      %p91 = por %p89, %p90
      %p92 = scmp.ne.s32.totalorder %s78, %s79
      %p93 = scmp.eq.s32.totalorder %s24, 2
      %p94 = por %p92, %p93
      %p96 = scmp.ne.s32.totalorder %s79, %s95
      %p97 = scmp.eq.s32.totalorder %s24, 0
      %p98 = por %p96, %p97
      %s99 = ssub.s32 %s18, %s25
      %p100 = scmp.eq.s32.totalorder %s99, 0
      %s102 = sadd.s32 %s101, 1
      %s103 = scalar_select %p100, %s101, %s102
      %p106 = pneg %p100
      %p107 = scmp.eq.s32.totalorder %s18, 2
      %p108 = por %p106, %p107
      %p109 = scmp.ne.s32.totalorder %s101, %s104
      %p110 = scmp.eq.s32.totalorder %s18, 0
      %p111 = por %p109, %p110
      %p112 = scmp.ne.s32.totalorder %s101, %s104
      %p113 = scmp.eq.s32.totalorder %s23, 2
      %p114 = por %p112, %p113
      %p115 = scmp.ne.s32.totalorder %s104, %s105
      %p116 = scmp.eq.s32.totalorder %s23, 0
      %p117 = por %p115, %p116
      %p118 = scmp.ne.s32.totalorder %s104, %s105
      %p119 = scmp.eq.s32.totalorder %s24, 2
      %p120 = por %p118, %p119
      %p122 = scmp.ne.s32.totalorder %s105, %s121
      %p123 = scmp.eq.s32.totalorder %s24, 0
      %p124 = por %p122, %p123
      %s125 = ssub.s32 %s18, %s25
      %p126 = scmp.eq.s32.totalorder %s125, 0
      %s128 = sadd.s32 %s127, 1
      %s129 = scalar_select %p126, %s127, %s128
      %p132 = pneg %p126
      %p133 = scmp.eq.s32.totalorder %s18, 2
      %p134 = por %p132, %p133
      %p135 = scmp.ne.s32.totalorder %s127, %s130
      %p136 = scmp.eq.s32.totalorder %s18, 0
      %p137 = por %p135, %p136
      %p138 = scmp.ne.s32.totalorder %s127, %s130
      %p139 = scmp.eq.s32.totalorder %s23, 2
      %p140 = por %p138, %p139
      %p141 = scmp.ne.s32.totalorder %s130, %s131
      %p142 = scmp.eq.s32.totalorder %s23, 0
      %p143 = por %p141, %p142
      %p144 = scmp.ne.s32.totalorder %s130, %s131
      %p145 = scmp.eq.s32.totalorder %s24, 2
      %p146 = por %p144, %p145
      %p148 = scmp.ne.s32.totalorder %s131, %s147
      %p149 = scmp.eq.s32.totalorder %s24, 0
      %p150 = por %p148, %p149
      %s151 = ssub.s32 %s18, %s25
      %p152 = scmp.eq.s32.totalorder %s151, 0
      %s154 = sadd.s32 %s153, 1
      %s155 = scalar_select %p152, %s153, %s154
      %p158 = pneg %p152
      %p159 = scmp.eq.s32.totalorder %s18, 2
      %p160 = por %p158, %p159
      %p161 = scmp.ne.s32.totalorder %s153, %s156
      %p162 = scmp.eq.s32.totalorder %s18, 0
      %p163 = por %p161, %p162
      %p164 = scmp.ne.s32.totalorder %s153, %s156
      %p165 = scmp.eq.s32.totalorder %s23, 2
      %p166 = por %p164, %p165
      %p167 = scmp.ne.s32.totalorder %s156, %s157
      %p168 = scmp.eq.s32.totalorder %s23, 0
      %p169 = por %p167, %p168
      %p170 = scmp.ne.s32.totalorder %s156, %s157
      %p171 = scmp.eq.s32.totalorder %s24, 2
      %p172 = por %p170, %p171
      %p174 = scmp.ne.s32.totalorder %s157, %s173
      %p175 = scmp.eq.s32.totalorder %s24, 0
      %p176 = por %p174, %p175
      %p177 = scmp.le.s32.totalorder 1, %s18
      %p178 = scmp.lt.s32.totalorder %s18, 4
      %p179 = pnand %p177, %p178
      %p180 = pneg %p179
      // Predicated region
      $region9: #{gaussian_policy_forward.1} parent=5 // pred_check
        _
      $region10: #{gaussian_policy_forward.1} parent=5 // pred_check_branch
        %182 = sbr.rel (%p179) target = $region12
      $region11: #{gaussian_policy_forward.1} parent=5 // pred_region
        %s183 = ssub.s32 %s18, 1
        // Predicated region
        $region13: #{gaussian_policy_forward.1} parent=11 // pred_check
          %p184 = pneg %p39
        $region14: #{gaussian_policy_forward.1} parent=11 // pred_check_branch
          %186 = sbr.rel (%p184) target = $region16
        $region15: #{gaussian_policy_forward.1} parent=11 // pred_region
          %s188 = ssub.s32 128, 128
          %189 = vsyncadd [#allocation3], %s188
          %s191 = sshll.u32 [#allocation2], 4
          %s192 = int_to_ptr.vmem [resolvable:$true] %s191
          %194 = dma.hbm_to_vmem [thread:$0]  %s0, 128, %s192, [#allocation3]
        $region16: #{gaussian_policy_forward.1} parent=11 // pred_fallthru
          _
      $region12: #{gaussian_policy_forward.1} parent=5 // pred_fallthru
        _
      %p195 = scmp.lt.s32.totalorder %s18, 3
      // Predicated region
      $region17: #{gaussian_policy_forward.1} parent=5 // pred_check
        %p196 = pneg %p195
      $region18: #{gaussian_policy_forward.1} parent=5 // pred_check_branch
        %198 = sbr.rel (%p196) target = $region20
      $region19: #{gaussian_policy_forward.1} parent=5 // pred_region
        // Predicated region
        $region21: #{gaussian_policy_forward.1} parent=19 // pred_check
          %p199 = pneg %p59
        $region22: #{gaussian_policy_forward.1} parent=19 // pred_check_branch
          %201 = sbr.rel (%p199) target = $region24
        $region23: #{gaussian_policy_forward.1} parent=19 // pred_region
          %s202 = sand.u32 %s18, 1
          %s203 = scalar_lea.sflag [#allocation5], %s202
          %s204 = sand.u32 %s49, 1
          %s205 = smul.addr %s204, 48
          %s206 = scalar_lea.vmem [#allocation4], %s205
          %s208 = ssub.s32 768, 768
          %209 = vsyncadd %s203, %s208
          %s210 = smul.addr %s18, 12
          %s211 = smul.addr %s210, 64
          %s212 = scalar_lea.hbm %s1, %s211
          %s213 = sshll.u32 %s206, 4
          %s214 = int_to_ptr.vmem [resolvable:$true] %s213
          %219 = dma.hbm_to_vmem [thread:$0]  %s212, 768, %s214, %s203, 256, 256, 16
        $region24: #{gaussian_policy_forward.1} parent=19 // pred_fallthru
          _
        // Predicated region
        $region25: #{gaussian_policy_forward.1} parent=19 // pred_check
          %p220 = pneg %p85
        $region26: #{gaussian_policy_forward.1} parent=19 // pred_check_branch
          %222 = sbr.rel (%p220) target = $region28
        $region27: #{gaussian_policy_forward.1} parent=19 // pred_region
          %s223 = sand.u32 %s18, 1
          %s224 = scalar_lea.sflag [#allocation5], %s223
          %s225 = sand.u32 %s75, 1
          %s226 = smul.addr %s225, 768
          %s227 = scalar_lea.vmem [#allocation6], %s226
          %s229 = ssub.s32 12288, 12288
          %230 = vsyncadd %s224, %s229
          %s231 = smul.addr %s18, 192
          %s232 = smul.addr %s231, 64
          %s233 = scalar_lea.hbm %s2, %s232
          %s234 = sshll.u32 %s227, 4
          %s235 = int_to_ptr.vmem [resolvable:$true] %s234
          %240 = dma.hbm_to_vmem [thread:$0]  %s233, 12288, %s235, %s224, 192, 192, 12
        $region28: #{gaussian_policy_forward.1} parent=19 // pred_fallthru
          _
        // Predicated region
        $region29: #{gaussian_policy_forward.1} parent=19 // pred_check
          %p241 = pneg %p111
        $region30: #{gaussian_policy_forward.1} parent=19 // pred_check_branch
          %243 = sbr.rel (%p241) target = $region32
        $region31: #{gaussian_policy_forward.1} parent=19 // pred_region
          %s244 = sand.u32 %s18, 1
          %s245 = scalar_lea.sflag [#allocation8], %s244
          %s246 = sand.u32 %s101, 1
          %s247 = smul.addr %s246, 384
          %s248 = scalar_lea.vmem [#allocation7], %s247
          %s250 = ssub.s32 6144, 6144
          %251 = vsyncadd %s245, %s250
          %s252 = smul.addr %s18, 96
          %s253 = smul.addr %s252, 64
          %s254 = scalar_lea.hbm %s3, %s253
          %s255 = sshll.u32 %s248, 4
          %s256 = int_to_ptr.vmem [resolvable:$true] %s255
          %261 = dma.hbm_to_vmem [thread:$0]  %s254, 6144, %s256, %s245, 128, 128, 8
        $region32: #{gaussian_policy_forward.1} parent=19 // pred_fallthru
          _
        // Predicated region
        $region33: #{gaussian_policy_forward.1} parent=19 // pred_check
          %p262 = pneg %p137
        $region34: #{gaussian_policy_forward.1} parent=19 // pred_check_branch
          %264 = sbr.rel (%p262) target = $region36
        $region35: #{gaussian_policy_forward.1} parent=19 // pred_region
          %s265 = sand.u32 %s18, 1
          %s266 = scalar_lea.sflag [#allocation8], %s265
          %s267 = sand.u32 %s127, 1
          %s268 = smul.addr %s267, 9
          %s269 = scalar_lea.vmem [#allocation9], %s268
          %s271 = ssub.s32 144, 144
          %272 = vsyncadd %s266, %s271
          %s273 = smul.addr %s18, 9
          %s274 = smul.addr %s273, 16
          %s275 = scalar_lea.hbm %s4, %s274
          %s277 = sshll.u32 %s269, 4
          %s278 = int_to_ptr.vmem [resolvable:$true] %s277
          %280 = dma.hbm_to_vmem [thread:$0]  %s275, 144, %s278, %s266
        $region36: #{gaussian_policy_forward.1} parent=19 // pred_fallthru
          _
      $region20: #{gaussian_policy_forward.1} parent=5 // pred_fallthru
        _
      %p281 = scmp.le.s32.totalorder 1, %s18
      %p282 = scmp.lt.s32.totalorder %s18, 4
      %p283 = pnand %p281, %p282
      %p284 = pneg %p283
      // Predicated region
      $region37: #{gaussian_policy_forward.1} parent=5 // pred_check
        _
      $region38: #{gaussian_policy_forward.1} parent=5 // pred_check_branch
        %286 = sbr.rel (%p283) target = $region40
      $region39: #{gaussian_policy_forward.1} parent=5 // pred_region
        %s287 = ssub.s32 %s18, 1
        // Predicated region
        $region41: #{gaussian_policy_forward.1} parent=39 // pred_check
          %p288 = pneg %p39
        $region42: #{gaussian_policy_forward.1} parent=39 // pred_check_branch
          %290 = sbr.rel (%p288) target = $region44
        $region43: #{gaussian_policy_forward.1} parent=39 // pred_region
          %291 = dma.done [#allocation3], 128
        $region44: #{gaussian_policy_forward.1} parent=39 // pred_fallthru
          _
        %s292 = sand.u32 %s23, 1
        %s293 = scalar_lea.sflag [#allocation5], %s292
        %s294 = sand.u32 %s52, 1
        %s295 = smul.addr %s294, 48
        %s296 = scalar_lea.vmem [#allocation4], %s295
        // Predicated region
        $region45: #{gaussian_policy_forward.1} parent=39 // pred_check
          %p297 = pneg %p65
        $region46: #{gaussian_policy_forward.1} parent=39 // pred_check_branch
          %299 = sbr.rel (%p297) target = $region48
        $region47: #{gaussian_policy_forward.1} parent=39 // pred_region
          %300 = dma.done %s293, 768
        $region48: #{gaussian_policy_forward.1} parent=39 // pred_fallthru
          _
        %s301 = sand.u32 %s23, 1
        %s302 = scalar_lea.sflag [#allocation5], %s301
        %s303 = sand.u32 %s78, 1
        %s304 = smul.addr %s303, 768
        %s305 = scalar_lea.vmem [#allocation6], %s304
        // Predicated region
        $region49: #{gaussian_policy_forward.1} parent=39 // pred_check
          %p306 = pneg %p91
        $region50: #{gaussian_policy_forward.1} parent=39 // pred_check_branch
          %308 = sbr.rel (%p306) target = $region52
        $region51: #{gaussian_policy_forward.1} parent=39 // pred_region
          %309 = dma.done %s302, 12288
        $region52: #{gaussian_policy_forward.1} parent=39 // pred_fallthru
          _
        %s310 = sand.u32 %s23, 1
        %s311 = scalar_lea.sflag [#allocation8], %s310
        %s312 = sand.u32 %s104, 1
        %s313 = smul.addr %s312, 384
        %s314 = scalar_lea.vmem [#allocation7], %s313
        // Predicated region
        $region53: #{gaussian_policy_forward.1} parent=39 // pred_check
          %p315 = pneg %p117
        $region54: #{gaussian_policy_forward.1} parent=39 // pred_check_branch
          %317 = sbr.rel (%p315) target = $region56
        $region55: #{gaussian_policy_forward.1} parent=39 // pred_region
          %318 = dma.done %s311, 6144
        $region56: #{gaussian_policy_forward.1} parent=39 // pred_fallthru
          _
        %s319 = sand.u32 %s23, 1
        %s320 = scalar_lea.sflag [#allocation8], %s319
        %s321 = sand.u32 %s130, 1
        %s322 = smul.addr %s321, 9
        %s323 = scalar_lea.vmem [#allocation9], %s322
        // Predicated region
        $region57: #{gaussian_policy_forward.1} parent=39 // pred_check
          %p324 = pneg %p143
        $region58: #{gaussian_policy_forward.1} parent=39 // pred_check_branch
          %326 = sbr.rel (%p324) target = $region60
        $region59: #{gaussian_policy_forward.1} parent=39 // pred_region
          %327 = dma.done %s320, 144
        $region60: #{gaussian_policy_forward.1} parent=39 // pred_fallthru
          _
        %p328 = pneg %p39
        %p329 = pneg %p36
        %s330 = sand.u32 %s23, 1
        %s331 = scalar_lea.sflag [#allocation5], %s330
        %s332 = sand.u32 %s52, 1
        %s333 = smul.addr %s332, 48
        %s334 = scalar_lea.vmem [#allocation4], %s333
        %p335 = pneg %p65
        %p336 = pneg %p62
        %s337 = sand.u32 %s23, 1
        %s338 = scalar_lea.sflag [#allocation5], %s337
        %s339 = sand.u32 %s78, 1
        %s340 = smul.addr %s339, 768
        %s341 = scalar_lea.vmem [#allocation6], %s340
        %p342 = pneg %p91
        %p343 = pneg %p88
        %s344 = sand.u32 %s23, 1
        %s345 = scalar_lea.sflag [#allocation8], %s344
        %s346 = sand.u32 %s104, 1
        %s347 = smul.addr %s346, 384
        %s348 = scalar_lea.vmem [#allocation7], %s347
        %p349 = pneg %p117
        %p350 = pneg %p114
        %s351 = sand.u32 %s23, 1
        %s352 = scalar_lea.sflag [#allocation8], %s351
        %s353 = sand.u32 %s130, 1
        %s354 = smul.addr %s353, 9
        %s355 = scalar_lea.vmem [#allocation9], %s354
        %p356 = pneg %p143
        %p357 = pneg %p140
        %p358 = pneg %p169
        %p359 = pneg %p166
        %p360 = scmp.lt.s32.totalorder %s23, 2
        %s361 = scalar_select %p360, %s23, 2
        %s362 = smul.addr %s361, 2
        %s363 = smul.addr %s362, 8
        %s364 = scalar_lea.vmem %s5, %s363
        %p365 = scmp.lt.s32.totalorder %s23, 2
        %s366 = scalar_select %p365, %s23, 2
        %s367 = smul.addr %s366, 2
        %s368 = smul.addr %s367, 8
        %s369 = scalar_lea.vmem %s5, %s368
        %v371 = vld [vmem:[#allocation2] sm:$0xff]
        %v372 = vpack.c.bf16 %v371, %v371
        %v373 = vld [vmem:[%s323] sm:$0xf]
        %v374 = vld [vmem:[%s323 + $0x4] sm:$0x7]
        %v375 = vld [vmem:[%s323 + $0x7] sm:$0x3]
        %v376 = vld [vmem:[%s296] sm:$0xff]
        %v377 = vld [vmem:[%s296 + $0x8] sm:$0xff]
        %v378 = vld [vmem:[%s296 + $0x10] sm:$0xff]
        %v379 = vld [vmem:[%s296 + $0x18] sm:$0xff]
        %v380 = vld [vmem:[%s296 + $0x20] sm:$0xff]
        %v381 = vld [vmem:[%s296 + $0x28] sm:$0xff]
        %v383 = vlaneseq
        %v384 = vshrl.u32 %v383, 7
        %v385 = vsub.s32 0, %v384
        %v386 = vrot.slane %v373, %v385
        %v387 = vlaneseq
        %v388 = vshrl.u32 %v387, 7
        %v389 = vsub.s32 1, %v388
        %v390 = vrot.slane %v373, %v389
        %v391 = vlaneseq
        %v392 = vshrl.u32 %v391, 7
        %v393 = vsub.s32 2, %v392
        %v394 = vrot.slane %v373, %v393
        %v395 = vlaneseq
        %v396 = vshrl.u32 %v395, 7
        %v397 = vsub.s32 3, %v396
        %v398 = vrot.slane %v373, %v397
        %v409 = vunpack.c.l.b16 %v376
        %v410 = vunpack.c.h.b16 %v376
        %v411 = vunpack.c.l.b16 %v377
        %v412 = vunpack.c.h.b16 %v377
        %v413 = vunpack.c.l.b16 %v378
        %v414 = vunpack.c.h.b16 %v378
        %v415 = vunpack.c.l.b16 %v379
        %v416 = vunpack.c.h.b16 %v379
        %v417 = vunpack.c.l.b16 %v380
        %v418 = vunpack.c.h.b16 %v380
        %v419 = vunpack.c.l.b16 %v381
        %v420 = vunpack.c.h.b16 %v381
        %v421 = vpack.c.b16 %v413, %v409
        %v422 = vpack.c.b16 %v414, %v410
        %v423 = vpack.c.b16 %v415, %v411
        %v424 = vpack.c.b16 %v416, %v412
        %v425 = vpack.c.b16 %v417, %v417
        %v426 = vpack.c.b16 %v418, %v418
        %v427 = vpack.c.b16 %v419, %v419
        %v428 = vpack.c.b16 %v420, %v420
        %vm433 = vcmask 195584
        %v435 = vsel %vm433, %v372, 0
        %vm437 = vcmask 1043456
        %v439 = vsel %vm437, %v425, 0
        %v442 = vsel %vm437, %v426, 0
        %v445 = vsel %vm437, %v427, 0
        %v448 = vsel %vm437, %v428, 0
        %450 = vmatprep.subr.bf16.mxu0 0
        %451 = vmatpush1.bf16.msra.mxu0 0
        %452 = vmatprep.subr.bf16.mxu0 0
        %453 = vmatpush1.bf16.msra.mxu0 0
        %454 = vmatprep.subr.bf16.mxu0 0
        %455 = vmatpush1.bf16.msra.mxu0 0
        %456 = vmatprep.subr.bf16.mxu0 0
        %457 = vmatpush1.bf16.msra.mxu0 0
        %458 = vmatprep.subr.bf16.mxu0 0
        %459 = vmatpush1.bf16.msra.mxu0 0
        %460 = vmatprep.subr.bf16.mxu0 0
        %461 = vmatpush1.bf16.msra.mxu0 0
        %462 = vmatprep.subr.bf16.mxu0 %v442
        %463 = vmatpush1.bf16.msra.mxu0 %v439
        %464 = vmatprep.subr.bf16.mxu0 %v422
        %465 = vmatpush1.bf16.msra.mxu0 %v421
        %466 = vmatprep.subr.bf16.mxu0 0
        %467 = vmatpush2.bf16.msra.mxu0 0
        %468 = vmatprep.subr.bf16.mxu0 0
        %469 = vmatpush2.bf16.msra.mxu0 0
        %470 = vmatprep.subr.bf16.mxu0 0
        %471 = vmatpush2.bf16.msra.mxu0 0
        %472 = vmatprep.subr.bf16.mxu0 0
        %473 = vmatpush2.bf16.msra.mxu0 0
        %474 = vmatprep.subr.bf16.mxu0 0
        %475 = vmatpush2.bf16.msra.mxu0 0
        %476 = vmatprep.subr.bf16.mxu0 0
        %477 = vmatpush2.bf16.msra.mxu0 0
        %478 = vmatprep.subr.bf16.mxu0 0
        %479 = vmatpush2.bf16.msra.mxu0 0
        %480 = vmatprep.subr.bf16.mxu0 0
        %481 = vmatpush2.bf16.msra.mxu0 0
        %482 = vmatprep.mubr.bf16.mxu0 0
        %483 = vmatmul.mubr.bf16.gmra.mxu0 %v435
        %v484 = vpop.f32.mrf.mxu0
        %v485 = vadd.f32 %v386, %v484
        %v486 = vpop.f32.mrf.mxu0
        %v487 = vadd.f32 %v390, %v486
        %v488 = vpop.f32.mrf.mxu0
        %v489 = vpop.f32.mrf.mxu0
        %490 = vdwg.mxu0
        %491 = vmatprep.subr.bf16.mxu0 0
        %492 = vmatpush1.bf16.msra.mxu0 0
        %493 = vmatprep.subr.bf16.mxu0 0
        %494 = vmatpush1.bf16.msra.mxu0 0
        %495 = vmatprep.subr.bf16.mxu0 0
        %496 = vmatpush1.bf16.msra.mxu0 0
        %497 = vmatprep.subr.bf16.mxu0 0
        %498 = vmatpush1.bf16.msra.mxu0 0
        %499 = vmatprep.subr.bf16.mxu0 0
        %500 = vmatpush1.bf16.msra.mxu0 0
        %501 = vmatprep.subr.bf16.mxu0 0
        %502 = vmatpush1.bf16.msra.mxu0 0
        %503 = vmatprep.subr.bf16.mxu0 %v448
        %504 = vmatpush1.bf16.msra.mxu0 %v445
        %505 = vmatprep.subr.bf16.mxu0 %v424
        %506 = vmatpush1.bf16.msra.mxu0 %v423
        %507 = vmatprep.subr.bf16.mxu0 0
        %508 = vmatpush2.bf16.msra.mxu0 0
        %509 = vmatprep.subr.bf16.mxu0 0
        %510 = vmatpush2.bf16.msra.mxu0 0
        %511 = vmatprep.subr.bf16.mxu0 0
        %512 = vmatpush2.bf16.msra.mxu0 0
        %513 = vmatprep.subr.bf16.mxu0 0
        %514 = vmatpush2.bf16.msra.mxu0 0
        %515 = vmatprep.subr.bf16.mxu0 0
        %516 = vmatpush2.bf16.msra.mxu0 0
        %517 = vmatprep.subr.bf16.mxu0 0
        %518 = vmatpush2.bf16.msra.mxu0 0
        %519 = vmatprep.subr.bf16.mxu0 0
        %520 = vmatpush2.bf16.msra.mxu0 0
        %521 = vmatprep.subr.bf16.mxu0 0
        %522 = vmatpush2.bf16.msra.mxu0 0
        %523 = vmatprep.mubr.bf16.mxu0 0
        %524 = vmatmul.mubr.bf16.gmra.mxu0 %v435
        %v525 = vpop.f32.mrf.mxu0
        %v526 = vadd.f32 %v394, %v525
        %v527 = vpop.f32.mrf.mxu0
        %v528 = vadd.f32 %v398, %v527
        %v529 = vpop.f32.mrf.mxu0
        %v530 = vpop.f32.mrf.mxu0
        %531 = vdwg.mxu0
        %v532 = vmax.f32 %v485, 0.0
        %v533 = vmax.f32 %v487, 0.0
        %v534 = vmax.f32 %v526, 0.0
        %v535 = vmax.f32 %v528, 0.0
        %v536 = vpack.c.bf16 %v532, %v532
        %v537 = vpack.c.bf16 %v533, %v533
        %v538 = vpack.c.bf16 %v534, %v534
        %v539 = vpack.c.bf16 %v535, %v535
        %v540 = vld [vmem:[%s305] sm:$0xff]
        %v541 = vld [vmem:[%s305 + $0x8] sm:$0xf]
        %v542 = vld [vmem:[%s305 + $0xc] sm:$0xff]
        %v543 = vld [vmem:[%s305 + $0x14] sm:$0xf]
        %v544 = vld [vmem:[%s305 + $0x18] sm:$0xff]
        %v545 = vld [vmem:[%s305 + $0x20] sm:$0xf]
        %v546 = vld [vmem:[%s305 + $0x24] sm:$0xff]
        %v547 = vld [vmem:[%s305 + $0x2c] sm:$0xf]
        %v548 = vld [vmem:[%s305 + $0x30] sm:$0xff]
        %v549 = vld [vmem:[%s305 + $0x38] sm:$0xf]
        %v550 = vld [vmem:[%s305 + $0x3c] sm:$0xff]
        %v551 = vld [vmem:[%s305 + $0x44] sm:$0xf]
        %v552 = vld [vmem:[%s305 + $0x48] sm:$0xff]
        %v553 = vld [vmem:[%s305 + $0x50] sm:$0xf]
        %v554 = vld [vmem:[%s305 + $0x54] sm:$0xff]
        %v555 = vld [vmem:[%s305 + $0x5c] sm:$0xf]
        %v556 = vld [vmem:[%s305 + $0x60] sm:$0xff]
        %v557 = vld [vmem:[%s305 + $0x68] sm:$0xf]
        %v558 = vld [vmem:[%s305 + $0x6c] sm:$0xff]
        %v559 = vld [vmem:[%s305 + $0x74] sm:$0xf]
        %v560 = vld [vmem:[%s305 + $0x78] sm:$0xff]
        %v561 = vld [vmem:[%s305 + $0x80] sm:$0xf]
        %v562 = vld [vmem:[%s305 + $0x84] sm:$0xff]
        %v563 = vld [vmem:[%s305 + $0x8c] sm:$0xf]
        %v564 = vld [vmem:[%s305 + $0x90] sm:$0xff]
        %v565 = vld [vmem:[%s305 + $0x98] sm:$0xf]
        %v566 = vld [vmem:[%s305 + $0x9c] sm:$0xff]
        %v567 = vld [vmem:[%s305 + $0xa4] sm:$0xf]
        %v568 = vld [vmem:[%s305 + $0xa8] sm:$0xff]
        %v569 = vld [vmem:[%s305 + $0xb0] sm:$0xf]
        %v570 = vld [vmem:[%s305 + $0xb4] sm:$0xff]
        %v571 = vld [vmem:[%s305 + $0xbc] sm:$0xf]
        %v572 = vld [vmem:[%s305 + $0xc0] sm:$0xff]
        %v573 = vld [vmem:[%s305 + $0xc8] sm:$0xf]
        %v574 = vld [vmem:[%s305 + $0xcc] sm:$0xff]
        %v575 = vld [vmem:[%s305 + $0xd4] sm:$0xf]
        %v576 = vld [vmem:[%s305 + $0xd8] sm:$0xff]
        %v577 = vld [vmem:[%s305 + $0xe0] sm:$0xf]
        %v578 = vld [vmem:[%s305 + $0xe4] sm:$0xff]
        %v579 = vld [vmem:[%s305 + $0xec] sm:$0xf]
        %v580 = vld [vmem:[%s305 + $0xf0] sm:$0xff]
        %v581 = vld [vmem:[%s305 + $0xf8] sm:$0xf]
        %v582 = vld [vmem:[%s305 + $0xfc] sm:$0xff]
        %v583 = vld [vmem:[%s305 + $0x104] sm:$0xf]
        %v584 = vld [vmem:[%s305 + $0x108] sm:$0xff]
        %v585 = vld [vmem:[%s305 + $0x110] sm:$0xf]
        %v586 = vld [vmem:[%s305 + $0x114] sm:$0xff]
        %v587 = vld [vmem:[%s305 + $0x11c] sm:$0xf]
        %v588 = vld [vmem:[%s305 + $0x120] sm:$0xff]
        %v589 = vld [vmem:[%s305 + $0x128] sm:$0xf]
        %v590 = vld [vmem:[%s305 + $0x12c] sm:$0xff]
        %v591 = vld [vmem:[%s305 + $0x134] sm:$0xf]
        %v592 = vld [vmem:[%s305 + $0x138] sm:$0xff]
        %v593 = vld [vmem:[%s305 + $0x140] sm:$0xf]
        %v594 = vld [vmem:[%s305 + $0x144] sm:$0xff]
        %v595 = vld [vmem:[%s305 + $0x14c] sm:$0xf]
        %v596 = vld [vmem:[%s305 + $0x150] sm:$0xff]
        %v597 = vld [vmem:[%s305 + $0x158] sm:$0xf]
        %v598 = vld [vmem:[%s305 + $0x15c] sm:$0xff]
        %v599 = vld [vmem:[%s305 + $0x164] sm:$0xf]
        %v600 = vld [vmem:[%s305 + $0x168] sm:$0xff]
        %v601 = vld [vmem:[%s305 + $0x170] sm:$0xf]
        %v602 = vld [vmem:[%s305 + $0x174] sm:$0xff]
        %v603 = vld [vmem:[%s305 + $0x17c] sm:$0xf]
        %v604 = vld [vmem:[%s305 + $0x180] sm:$0xff]
        %v605 = vld [vmem:[%s305 + $0x188] sm:$0xf]
        %v606 = vld [vmem:[%s305 + $0x18c] sm:$0xff]
        %v607 = vld [vmem:[%s305 + $0x194] sm:$0xf]
        %v608 = vld [vmem:[%s305 + $0x198] sm:$0xff]
        %v609 = vld [vmem:[%s305 + $0x1a0] sm:$0xf]
        %v610 = vld [vmem:[%s305 + $0x1a4] sm:$0xff]
        %v611 = vld [vmem:[%s305 + $0x1ac] sm:$0xf]
        %v612 = vld [vmem:[%s305 + $0x1b0] sm:$0xff]
        %v613 = vld [vmem:[%s305 + $0x1b8] sm:$0xf]
        %v614 = vld [vmem:[%s305 + $0x1bc] sm:$0xff]
        %v615 = vld [vmem:[%s305 + $0x1c4] sm:$0xf]
        %v616 = vld [vmem:[%s305 + $0x1c8] sm:$0xff]
        %v617 = vld [vmem:[%s305 + $0x1d0] sm:$0xf]
        %v618 = vld [vmem:[%s305 + $0x1d4] sm:$0xff]
        %v619 = vld [vmem:[%s305 + $0x1dc] sm:$0xf]
        %v620 = vld [vmem:[%s305 + $0x1e0] sm:$0xff]
        %v621 = vld [vmem:[%s305 + $0x1e8] sm:$0xf]
        %v622 = vld [vmem:[%s305 + $0x1ec] sm:$0xff]
        %v623 = vld [vmem:[%s305 + $0x1f4] sm:$0xf]
        %v624 = vld [vmem:[%s305 + $0x1f8] sm:$0xff]
        %v625 = vld [vmem:[%s305 + $0x200] sm:$0xf]
        %v626 = vld [vmem:[%s305 + $0x204] sm:$0xff]
        %v627 = vld [vmem:[%s305 + $0x20c] sm:$0xf]
        %v628 = vld [vmem:[%s305 + $0x210] sm:$0xff]
        %v629 = vld [vmem:[%s305 + $0x218] sm:$0xf]
        %v630 = vld [vmem:[%s305 + $0x21c] sm:$0xff]
        %v631 = vld [vmem:[%s305 + $0x224] sm:$0xf]
        %v632 = vld [vmem:[%s305 + $0x228] sm:$0xff]
        %v633 = vld [vmem:[%s305 + $0x230] sm:$0xf]
        %v634 = vld [vmem:[%s305 + $0x234] sm:$0xff]
        %v635 = vld [vmem:[%s305 + $0x23c] sm:$0xf]
        %v636 = vld [vmem:[%s305 + $0x240] sm:$0xff]
        %v637 = vld [vmem:[%s305 + $0x248] sm:$0xf]
        %v638 = vld [vmem:[%s305 + $0x24c] sm:$0xff]
        %v639 = vld [vmem:[%s305 + $0x254] sm:$0xf]
        %v640 = vld [vmem:[%s305 + $0x258] sm:$0xff]
        %v641 = vld [vmem:[%s305 + $0x260] sm:$0xf]
        %v642 = vld [vmem:[%s305 + $0x264] sm:$0xff]
        %v643 = vld [vmem:[%s305 + $0x26c] sm:$0xf]
        %v644 = vld [vmem:[%s305 + $0x270] sm:$0xff]
        %v645 = vld [vmem:[%s305 + $0x278] sm:$0xf]
        %v646 = vld [vmem:[%s305 + $0x27c] sm:$0xff]
        %v647 = vld [vmem:[%s305 + $0x284] sm:$0xf]
        %v648 = vld [vmem:[%s305 + $0x288] sm:$0xff]
        %v649 = vld [vmem:[%s305 + $0x290] sm:$0xf]
        %v650 = vld [vmem:[%s305 + $0x294] sm:$0xff]
        %v651 = vld [vmem:[%s305 + $0x29c] sm:$0xf]
        %v652 = vld [vmem:[%s305 + $0x2a0] sm:$0xff]
        %v653 = vld [vmem:[%s305 + $0x2a8] sm:$0xf]
        %v654 = vld [vmem:[%s305 + $0x2ac] sm:$0xff]
        %v655 = vld [vmem:[%s305 + $0x2b4] sm:$0xf]
        %v656 = vld [vmem:[%s305 + $0x2b8] sm:$0xff]
        %v657 = vld [vmem:[%s305 + $0x2c0] sm:$0xf]
        %v658 = vld [vmem:[%s305 + $0x2c4] sm:$0xff]
        %v659 = vld [vmem:[%s305 + $0x2cc] sm:$0xf]
        %v660 = vld [vmem:[%s305 + $0x2d0] sm:$0xff]
        %v661 = vld [vmem:[%s305 + $0x2d8] sm:$0xf]
        %v662 = vld [vmem:[%s305 + $0x2dc] sm:$0xff]
        %v663 = vld [vmem:[%s305 + $0x2e4] sm:$0xf]
        %v664 = vld [vmem:[%s305 + $0x2e8] sm:$0xff]
        %v665 = vld [vmem:[%s305 + $0x2f0] sm:$0xf]
        %v666 = vld [vmem:[%s305 + $0x2f4] sm:$0xff]
        %v667 = vld [vmem:[%s305 + $0x2fc] sm:$0xf]
        %v669 = vlaneseq
        %v670 = vshrl.u32 %v669, 7
        %v671 = vsub.s32 0, %v670
        %v672 = vrot.slane %v374, %v671
        %v673 = vlaneseq
        %v674 = vshrl.u32 %v673, 7
        %v675 = vsub.s32 1, %v674
        %v676 = vrot.slane %v374, %v675
        %v677 = vlaneseq
        %v678 = vshrl.u32 %v677, 7
        %v679 = vsub.s32 2, %v678
        %v680 = vrot.slane %v374, %v679
        %v812 = vunpack.c.l.b16 %v540
        %v813 = vunpack.c.h.b16 %v540
        %v814 = vunpack.c.l.b16 %v541
        %v815 = vunpack.c.l.b16 %v542
        %v816 = vunpack.c.h.b16 %v542
        %v817 = vunpack.c.l.b16 %v543
        %v818 = vunpack.c.l.b16 %v544
        %v819 = vunpack.c.h.b16 %v544
        %v820 = vunpack.c.l.b16 %v545
        %v821 = vunpack.c.l.b16 %v546
        %v822 = vunpack.c.h.b16 %v546
        %v823 = vunpack.c.l.b16 %v547
        %v824 = vunpack.c.l.b16 %v548
        %v825 = vunpack.c.h.b16 %v548
        %v826 = vunpack.c.l.b16 %v549
        %v827 = vunpack.c.l.b16 %v550
        %v828 = vunpack.c.h.b16 %v550
        %v829 = vunpack.c.l.b16 %v551
        %v830 = vunpack.c.l.b16 %v552
        %v831 = vunpack.c.h.b16 %v552
        %v832 = vunpack.c.l.b16 %v553
        %v833 = vunpack.c.l.b16 %v554
        %v834 = vunpack.c.h.b16 %v554
        %v835 = vunpack.c.l.b16 %v555
        %v836 = vunpack.c.l.b16 %v556
        %v837 = vunpack.c.h.b16 %v556
        %v838 = vunpack.c.l.b16 %v557
        %v839 = vunpack.c.l.b16 %v558
        %v840 = vunpack.c.h.b16 %v558
        %v841 = vunpack.c.l.b16 %v559
        %v842 = vunpack.c.l.b16 %v560
        %v843 = vunpack.c.h.b16 %v560
        %v844 = vunpack.c.l.b16 %v561
        %v845 = vunpack.c.l.b16 %v562
        %v846 = vunpack.c.h.b16 %v562
        %v847 = vunpack.c.l.b16 %v563
        %v848 = vunpack.c.l.b16 %v564
        %v849 = vunpack.c.h.b16 %v564
        %v850 = vunpack.c.l.b16 %v565
        %v851 = vunpack.c.l.b16 %v566
        %v852 = vunpack.c.h.b16 %v566
        %v853 = vunpack.c.l.b16 %v567
        %v854 = vunpack.c.l.b16 %v568
        %v855 = vunpack.c.h.b16 %v568
        %v856 = vunpack.c.l.b16 %v569
        %v857 = vunpack.c.l.b16 %v570
        %v858 = vunpack.c.h.b16 %v570
        %v859 = vunpack.c.l.b16 %v571
        %v860 = vunpack.c.l.b16 %v572
        %v861 = vunpack.c.h.b16 %v572
        %v862 = vunpack.c.l.b16 %v573
        %v863 = vunpack.c.l.b16 %v574
        %v864 = vunpack.c.h.b16 %v574
        %v865 = vunpack.c.l.b16 %v575
        %v866 = vunpack.c.l.b16 %v576
        %v867 = vunpack.c.h.b16 %v576
        %v868 = vunpack.c.l.b16 %v577
        %v869 = vunpack.c.l.b16 %v578
        %v870 = vunpack.c.h.b16 %v578
        %v871 = vunpack.c.l.b16 %v579
        %v872 = vunpack.c.l.b16 %v580
        %v873 = vunpack.c.h.b16 %v580
        %v874 = vunpack.c.l.b16 %v581
        %v875 = vunpack.c.l.b16 %v582
        %v876 = vunpack.c.h.b16 %v582
        %v877 = vunpack.c.l.b16 %v583
        %v878 = vunpack.c.l.b16 %v584
        %v879 = vunpack.c.h.b16 %v584
        %v880 = vunpack.c.l.b16 %v585
        %v881 = vunpack.c.l.b16 %v586
        %v882 = vunpack.c.h.b16 %v586
        %v883 = vunpack.c.l.b16 %v587
        %v884 = vunpack.c.l.b16 %v588
        %v885 = vunpack.c.h.b16 %v588
        %v886 = vunpack.c.l.b16 %v589
        %v887 = vunpack.c.l.b16 %v590
        %v888 = vunpack.c.h.b16 %v590
        %v889 = vunpack.c.l.b16 %v591
        %v890 = vunpack.c.l.b16 %v592
        %v891 = vunpack.c.h.b16 %v592
        %v892 = vunpack.c.l.b16 %v593
        %v893 = vunpack.c.l.b16 %v594
        %v894 = vunpack.c.h.b16 %v594
        %v895 = vunpack.c.l.b16 %v595
        %v896 = vunpack.c.l.b16 %v596
        %v897 = vunpack.c.h.b16 %v596
        %v898 = vunpack.c.l.b16 %v597
        %v899 = vunpack.c.l.b16 %v598
        %v900 = vunpack.c.h.b16 %v598
        %v901 = vunpack.c.l.b16 %v599
        %v902 = vunpack.c.l.b16 %v600
        %v903 = vunpack.c.h.b16 %v600
        %v904 = vunpack.c.l.b16 %v601
        %v905 = vunpack.c.l.b16 %v602
        %v906 = vunpack.c.h.b16 %v602
        %v907 = vunpack.c.l.b16 %v603
        %v908 = vunpack.c.l.b16 %v604
        %v909 = vunpack.c.h.b16 %v604
        %v910 = vunpack.c.l.b16 %v605
        %v911 = vunpack.c.l.b16 %v606
        %v912 = vunpack.c.h.b16 %v606
        %v913 = vunpack.c.l.b16 %v607
        %v914 = vunpack.c.l.b16 %v608
        %v915 = vunpack.c.h.b16 %v608
        %v916 = vunpack.c.l.b16 %v609
        %v917 = vunpack.c.l.b16 %v610
        %v918 = vunpack.c.h.b16 %v610
        %v919 = vunpack.c.l.b16 %v611
        %v920 = vunpack.c.l.b16 %v612
        %v921 = vunpack.c.h.b16 %v612
        %v922 = vunpack.c.l.b16 %v613
        %v923 = vunpack.c.l.b16 %v614
        %v924 = vunpack.c.h.b16 %v614
        %v925 = vunpack.c.l.b16 %v615
        %v926 = vunpack.c.l.b16 %v616
        %v927 = vunpack.c.h.b16 %v616
        %v928 = vunpack.c.l.b16 %v617
        %v929 = vunpack.c.l.b16 %v618
        %v930 = vunpack.c.h.b16 %v618
        %v931 = vunpack.c.l.b16 %v619
        %v932 = vunpack.c.l.b16 %v620
        %v933 = vunpack.c.h.b16 %v620
        %v934 = vunpack.c.l.b16 %v621
        %v935 = vunpack.c.l.b16 %v622
        %v936 = vunpack.c.h.b16 %v622
        %v937 = vunpack.c.l.b16 %v623
        %v938 = vunpack.c.l.b16 %v624
        %v939 = vunpack.c.h.b16 %v624
        %v940 = vunpack.c.l.b16 %v625
        %v941 = vunpack.c.l.b16 %v626
        %v942 = vunpack.c.h.b16 %v626
        %v943 = vunpack.c.l.b16 %v627
        %v944 = vunpack.c.l.b16 %v628
        %v945 = vunpack.c.h.b16 %v628
        %v946 = vunpack.c.l.b16 %v629
        %v947 = vunpack.c.l.b16 %v630
        %v948 = vunpack.c.h.b16 %v630
        %v949 = vunpack.c.l.b16 %v631
        %v950 = vunpack.c.l.b16 %v632
        %v951 = vunpack.c.h.b16 %v632
        %v952 = vunpack.c.l.b16 %v633
        %v953 = vunpack.c.l.b16 %v634
        %v954 = vunpack.c.h.b16 %v634
        %v955 = vunpack.c.l.b16 %v635
        %v956 = vunpack.c.l.b16 %v636
        %v957 = vunpack.c.h.b16 %v636
        %v958 = vunpack.c.l.b16 %v637
        %v959 = vunpack.c.l.b16 %v638
        %v960 = vunpack.c.h.b16 %v638
        %v961 = vunpack.c.l.b16 %v639
        %v962 = vunpack.c.l.b16 %v640
        %v963 = vunpack.c.h.b16 %v640
        %v964 = vunpack.c.l.b16 %v641
        %v965 = vunpack.c.l.b16 %v642
        %v966 = vunpack.c.h.b16 %v642
        %v967 = vunpack.c.l.b16 %v643
        %v968 = vunpack.c.l.b16 %v644
        %v969 = vunpack.c.h.b16 %v644
        %v970 = vunpack.c.l.b16 %v645
        %v971 = vunpack.c.l.b16 %v646
        %v972 = vunpack.c.h.b16 %v646
        %v973 = vunpack.c.l.b16 %v647
        %v974 = vunpack.c.l.b16 %v648
        %v975 = vunpack.c.h.b16 %v648
        %v976 = vunpack.c.l.b16 %v649
        %v977 = vunpack.c.l.b16 %v650
        %v978 = vunpack.c.h.b16 %v650
        %v979 = vunpack.c.l.b16 %v651
        %v980 = vunpack.c.l.b16 %v652
        %v981 = vunpack.c.h.b16 %v652
        %v982 = vunpack.c.l.b16 %v653
        %v983 = vunpack.c.l.b16 %v654
        %v984 = vunpack.c.h.b16 %v654
        %v985 = vunpack.c.l.b16 %v655
        %v986 = vunpack.c.l.b16 %v656
        %v987 = vunpack.c.h.b16 %v656
        %v988 = vunpack.c.l.b16 %v657
        %v989 = vunpack.c.l.b16 %v658
        %v990 = vunpack.c.h.b16 %v658
        %v991 = vunpack.c.l.b16 %v659
        %v992 = vunpack.c.l.b16 %v660
        %v993 = vunpack.c.h.b16 %v660
        %v994 = vunpack.c.l.b16 %v661
        %v995 = vunpack.c.l.b16 %v662
        %v996 = vunpack.c.h.b16 %v662
        %v997 = vunpack.c.l.b16 %v663
        %v998 = vunpack.c.l.b16 %v664
        %v999 = vunpack.c.h.b16 %v664
        %v1000 = vunpack.c.l.b16 %v665
        %v1001 = vunpack.c.l.b16 %v666
        %v1002 = vunpack.c.h.b16 %v666
        %v1003 = vunpack.c.l.b16 %v667
        %v1004 = vpack.c.b16 %v815, %v812
        %v1005 = vpack.c.b16 %v816, %v813
        %v1006 = vpack.c.b16 %v817, %v814
        %v1007 = vpack.c.b16 %v821, %v818
        %v1008 = vpack.c.b16 %v822, %v819
        %v1009 = vpack.c.b16 %v823, %v820
        %v1010 = vpack.c.b16 %v827, %v824
        %v1011 = vpack.c.b16 %v828, %v825
        %v1012 = vpack.c.b16 %v829, %v826
        %v1013 = vpack.c.b16 %v833, %v830
        %v1014 = vpack.c.b16 %v834, %v831
        %v1015 = vpack.c.b16 %v835, %v832
        %v1016 = vpack.c.b16 %v839, %v836
        %v1017 = vpack.c.b16 %v840, %v837
        %v1018 = vpack.c.b16 %v841, %v838
        %v1019 = vpack.c.b16 %v845, %v842
        %v1020 = vpack.c.b16 %v846, %v843
        %v1021 = vpack.c.b16 %v847, %v844
        %v1022 = vpack.c.b16 %v851, %v848
        %v1023 = vpack.c.b16 %v852, %v849
        %v1024 = vpack.c.b16 %v853, %v850
        %v1025 = vpack.c.b16 %v857, %v854
        %v1026 = vpack.c.b16 %v858, %v855
        %v1027 = vpack.c.b16 %v859, %v856
        %v1028 = vpack.c.b16 %v863, %v860
        %v1029 = vpack.c.b16 %v864, %v861
        %v1030 = vpack.c.b16 %v865, %v862
        %v1031 = vpack.c.b16 %v869, %v866
        %v1032 = vpack.c.b16 %v870, %v867
        %v1033 = vpack.c.b16 %v871, %v868
        %v1034 = vpack.c.b16 %v875, %v872
        %v1035 = vpack.c.b16 %v876, %v873
        %v1036 = vpack.c.b16 %v877, %v874
        %v1037 = vpack.c.b16 %v881, %v878
        %v1038 = vpack.c.b16 %v882, %v879
        %v1039 = vpack.c.b16 %v883, %v880
        %v1040 = vpack.c.b16 %v887, %v884
        %v1041 = vpack.c.b16 %v888, %v885
        %v1042 = vpack.c.b16 %v889, %v886
        %v1043 = vpack.c.b16 %v893, %v890
        %v1044 = vpack.c.b16 %v894, %v891
        %v1045 = vpack.c.b16 %v895, %v892
        %v1046 = vpack.c.b16 %v899, %v896
        %v1047 = vpack.c.b16 %v900, %v897
        %v1048 = vpack.c.b16 %v901, %v898
        %v1049 = vpack.c.b16 %v905, %v902
        %v1050 = vpack.c.b16 %v906, %v903
        %v1051 = vpack.c.b16 %v907, %v904
        %v1052 = vpack.c.b16 %v911, %v908
        %v1053 = vpack.c.b16 %v912, %v909
        %v1054 = vpack.c.b16 %v913, %v910
        %v1055 = vpack.c.b16 %v917, %v914
        %v1056 = vpack.c.b16 %v918, %v915
        %v1057 = vpack.c.b16 %v919, %v916
        %v1058 = vpack.c.b16 %v923, %v920
        %v1059 = vpack.c.b16 %v924, %v921
        %v1060 = vpack.c.b16 %v925, %v922
        %v1061 = vpack.c.b16 %v929, %v926
        %v1062 = vpack.c.b16 %v930, %v927
        %v1063 = vpack.c.b16 %v931, %v928
        %v1064 = vpack.c.b16 %v935, %v932
        %v1065 = vpack.c.b16 %v936, %v933
        %v1066 = vpack.c.b16 %v937, %v934
        %v1067 = vpack.c.b16 %v941, %v938
        %v1068 = vpack.c.b16 %v942, %v939
        %v1069 = vpack.c.b16 %v943, %v940
        %v1070 = vpack.c.b16 %v947, %v944
        %v1071 = vpack.c.b16 %v948, %v945
        %v1072 = vpack.c.b16 %v949, %v946
        %v1073 = vpack.c.b16 %v953, %v950
        %v1074 = vpack.c.b16 %v954, %v951
        %v1075 = vpack.c.b16 %v955, %v952
        %v1076 = vpack.c.b16 %v959, %v956
        %v1077 = vpack.c.b16 %v960, %v957
        %v1078 = vpack.c.b16 %v961, %v958
        %v1079 = vpack.c.b16 %v965, %v962
        %v1080 = vpack.c.b16 %v966, %v963
        %v1081 = vpack.c.b16 %v967, %v964
        %v1082 = vpack.c.b16 %v971, %v968
        %v1083 = vpack.c.b16 %v972, %v969
        %v1084 = vpack.c.b16 %v973, %v970
        %v1085 = vpack.c.b16 %v977, %v974
        %v1086 = vpack.c.b16 %v978, %v975
        %v1087 = vpack.c.b16 %v979, %v976
        %v1088 = vpack.c.b16 %v983, %v980
        %v1089 = vpack.c.b16 %v984, %v981
        %v1090 = vpack.c.b16 %v985, %v982
        %v1091 = vpack.c.b16 %v989, %v986
        %v1092 = vpack.c.b16 %v990, %v987
        %v1093 = vpack.c.b16 %v991, %v988
        %v1094 = vpack.c.b16 %v995, %v992
        %v1095 = vpack.c.b16 %v996, %v993
        %v1096 = vpack.c.b16 %v997, %v994
        %v1097 = vpack.c.b16 %v1001, %v998
        %v1098 = vpack.c.b16 %v1002, %v999
        %v1099 = vpack.c.b16 %v1003, %v1000
        %1196 = vmatprep.subr.bf16.mxu0 %v1026
        %1197 = vmatpush1.bf16.msra.mxu0 %v1025
        %1198 = vmatprep.subr.bf16.mxu0 %v1023
        %1199 = vmatpush1.bf16.msra.mxu0 %v1022
        %1200 = vmatprep.subr.bf16.mxu0 %v1020
        %1201 = vmatpush1.bf16.msra.mxu0 %v1019
        %1202 = vmatprep.subr.bf16.mxu0 %v1017
        %1203 = vmatpush1.bf16.msra.mxu0 %v1016
        %1204 = vmatprep.subr.bf16.mxu0 %v1014
        %1205 = vmatpush1.bf16.msra.mxu0 %v1013
        %1206 = vmatprep.subr.bf16.mxu0 %v1011
        %1207 = vmatpush1.bf16.msra.mxu0 %v1010
        %1208 = vmatprep.subr.bf16.mxu0 %v1008
        %1209 = vmatpush1.bf16.msra.mxu0 %v1007
        %1210 = vmatprep.subr.bf16.mxu0 %v1005
        %1211 = vmatpush1.bf16.msra.mxu0 %v1004
        %1212 = vmatprep.subr.bf16.mxu0 %v1050
        %1213 = vmatpush2.bf16.msra.mxu0 %v1049
        %1214 = vmatprep.subr.bf16.mxu0 %v1047
        %1215 = vmatpush2.bf16.msra.mxu0 %v1046
        %1216 = vmatprep.subr.bf16.mxu0 %v1044
        %1217 = vmatpush2.bf16.msra.mxu0 %v1043
        %1218 = vmatprep.subr.bf16.mxu0 %v1041
        %1219 = vmatpush2.bf16.msra.mxu0 %v1040
        %1220 = vmatprep.subr.bf16.mxu0 %v1038
        %1221 = vmatpush2.bf16.msra.mxu0 %v1037
        %1222 = vmatprep.subr.bf16.mxu0 %v1035
        %1223 = vmatpush2.bf16.msra.mxu0 %v1034
        %1224 = vmatprep.subr.bf16.mxu0 %v1032
        %1225 = vmatpush2.bf16.msra.mxu0 %v1031
        %1226 = vmatprep.subr.bf16.mxu0 %v1029
        %1227 = vmatpush2.bf16.msra.mxu0 %v1028
        %1228 = vmatprep.mubr.bf16.mxu0 %v537
        %1229 = vmatmul.mubr.bf16.gmra.mxu0 %v536
        %v1230 = vpop.f32.mrf.mxu0
        %v1231 = vadd.f32 %v672, %v1230
        %v1232 = vpop.f32.mrf.mxu0
        %v1233 = vadd.f32 %v676, %v1232
        %v1234 = vpop.f32.mrf.mxu0
        %v1235 = vpop.f32.mrf.mxu0
        %1236 = vdwg.mxu0
        %1237 = vmatprep.subr.bf16.mxu0 %v1074
        %1238 = vmatpush1.bf16.msra.mxu0 %v1073
        %1239 = vmatprep.subr.bf16.mxu0 %v1071
        %1240 = vmatpush1.bf16.msra.mxu0 %v1070
        %1241 = vmatprep.subr.bf16.mxu0 %v1068
        %1242 = vmatpush1.bf16.msra.mxu0 %v1067
        %1243 = vmatprep.subr.bf16.mxu0 %v1065
        %1244 = vmatpush1.bf16.msra.mxu0 %v1064
        %1245 = vmatprep.subr.bf16.mxu0 %v1062
        %1246 = vmatpush1.bf16.msra.mxu0 %v1061
        %1247 = vmatprep.subr.bf16.mxu0 %v1059
        %1248 = vmatpush1.bf16.msra.mxu0 %v1058
        %1249 = vmatprep.subr.bf16.mxu0 %v1056
        %1250 = vmatpush1.bf16.msra.mxu0 %v1055
        %1251 = vmatprep.subr.bf16.mxu0 %v1053
        %1252 = vmatpush1.bf16.msra.mxu0 %v1052
        %1253 = vmatprep.subr.bf16.mxu0 %v1098
        %1254 = vmatpush2.bf16.msra.mxu0 %v1097
        %1255 = vmatprep.subr.bf16.mxu0 %v1095
        %1256 = vmatpush2.bf16.msra.mxu0 %v1094
        %1257 = vmatprep.subr.bf16.mxu0 %v1092
        %1258 = vmatpush2.bf16.msra.mxu0 %v1091
        %1259 = vmatprep.subr.bf16.mxu0 %v1089
        %1260 = vmatpush2.bf16.msra.mxu0 %v1088
        %1261 = vmatprep.subr.bf16.mxu0 %v1086
        %1262 = vmatpush2.bf16.msra.mxu0 %v1085
        %1263 = vmatprep.subr.bf16.mxu0 %v1083
        %1264 = vmatpush2.bf16.msra.mxu0 %v1082
        %1265 = vmatprep.subr.bf16.mxu0 %v1080
        %1266 = vmatpush2.bf16.msra.mxu0 %v1079
        %1267 = vmatprep.subr.bf16.mxu0 %v1077
        %1268 = vmatpush2.bf16.msra.mxu0 %v1076
        %1269 = vmatprep.mubr.bf16.mxu0 %v539
        %1270 = vmatmul.mubr.bf16.gmra.mxu0 %v538
        %v1271 = vpop.f32.mrf.mxu0
        %v1272 = vadd.f32 %v1231, %v1271
        %v1273 = vpop.f32.mrf.mxu0
        %v1274 = vadd.f32 %v1233, %v1273
        %v1275 = vpop.f32.mrf.mxu0
        %v1276 = vpop.f32.mrf.mxu0
        %1277 = vdwg.mxu0
        %1278 = vmatprep.subr.bf16.mxu0 0
        %1279 = vmatpush1.bf16.msra.mxu0 %v1027
        %1280 = vmatprep.subr.bf16.mxu0 0
        %1281 = vmatpush1.bf16.msra.mxu0 %v1024
        %1282 = vmatprep.subr.bf16.mxu0 0
        %1283 = vmatpush1.bf16.msra.mxu0 %v1021
        %1284 = vmatprep.subr.bf16.mxu0 0
        %1285 = vmatpush1.bf16.msra.mxu0 %v1018
        %1286 = vmatprep.subr.bf16.mxu0 0
        %1287 = vmatpush1.bf16.msra.mxu0 %v1015
        %1288 = vmatprep.subr.bf16.mxu0 0
        %1289 = vmatpush1.bf16.msra.mxu0 %v1012
        %1290 = vmatprep.subr.bf16.mxu0 0
        %1291 = vmatpush1.bf16.msra.mxu0 %v1009
        %1292 = vmatprep.subr.bf16.mxu0 0
        %1293 = vmatpush1.bf16.msra.mxu0 %v1006
        %1294 = vmatprep.subr.bf16.mxu0 0
        %1295 = vmatpush2.bf16.msra.mxu0 %v1051
        %1296 = vmatprep.subr.bf16.mxu0 0
        %1297 = vmatpush2.bf16.msra.mxu0 %v1048
        %1298 = vmatprep.subr.bf16.mxu0 0
        %1299 = vmatpush2.bf16.msra.mxu0 %v1045
        %1300 = vmatprep.subr.bf16.mxu0 0
        %1301 = vmatpush2.bf16.msra.mxu0 %v1042
        %1302 = vmatprep.subr.bf16.mxu0 0
        %1303 = vmatpush2.bf16.msra.mxu0 %v1039
        %1304 = vmatprep.subr.bf16.mxu0 0
        %1305 = vmatpush2.bf16.msra.mxu0 %v1036
        %1306 = vmatprep.subr.bf16.mxu0 0
        %1307 = vmatpush2.bf16.msra.mxu0 %v1033
        %1308 = vmatprep.subr.bf16.mxu0 0
        %1309 = vmatpush2.bf16.msra.mxu0 %v1030
        %1310 = vmatprep.mubr.bf16.mxu0 %v537
        %1311 = vmatmul.mubr.bf16.gmra.mxu0 %v536
        %v1312 = vpop.f32.mrf.mxu0
        %v1313 = vadd.f32 %v680, %v1312
        %v1314 = vpop.f32.mrf.mxu0
        %v1315 = vpop.f32.mrf.mxu0
        %v1316 = vpop.f32.mrf.mxu0
        %1317 = vdwg.mxu0
        %1318 = vmatprep.subr.bf16.mxu0 0
        %1319 = vmatpush1.bf16.msra.mxu0 %v1075
        %1320 = vmatprep.subr.bf16.mxu0 0
        %1321 = vmatpush1.bf16.msra.mxu0 %v1072
        %1322 = vmatprep.subr.bf16.mxu0 0
        %1323 = vmatpush1.bf16.msra.mxu0 %v1069
        %1324 = vmatprep.subr.bf16.mxu0 0
        %1325 = vmatpush1.bf16.msra.mxu0 %v1066
        %1326 = vmatprep.subr.bf16.mxu0 0
        %1327 = vmatpush1.bf16.msra.mxu0 %v1063
        %1328 = vmatprep.subr.bf16.mxu0 0
        %1329 = vmatpush1.bf16.msra.mxu0 %v1060
        %1330 = vmatprep.subr.bf16.mxu0 0
        %1331 = vmatpush1.bf16.msra.mxu0 %v1057
        %1332 = vmatprep.subr.bf16.mxu0 0
        %1333 = vmatpush1.bf16.msra.mxu0 %v1054
        %1334 = vmatprep.subr.bf16.mxu0 0
        %1335 = vmatpush2.bf16.msra.mxu0 %v1099
        %1336 = vmatprep.subr.bf16.mxu0 0
        %1337 = vmatpush2.bf16.msra.mxu0 %v1096
        %1338 = vmatprep.subr.bf16.mxu0 0
        %1339 = vmatpush2.bf16.msra.mxu0 %v1093
        %1340 = vmatprep.subr.bf16.mxu0 0
        %1341 = vmatpush2.bf16.msra.mxu0 %v1090
        %1342 = vmatprep.subr.bf16.mxu0 0
        %1343 = vmatpush2.bf16.msra.mxu0 %v1087
        %1344 = vmatprep.subr.bf16.mxu0 0
        %1345 = vmatpush2.bf16.msra.mxu0 %v1084
        %1346 = vmatprep.subr.bf16.mxu0 0
        %1347 = vmatpush2.bf16.msra.mxu0 %v1081
        %1348 = vmatprep.subr.bf16.mxu0 0
        %1349 = vmatpush2.bf16.msra.mxu0 %v1078
        %1350 = vmatprep.mubr.bf16.mxu0 %v539
        %1351 = vmatmul.mubr.bf16.gmra.mxu0 %v538
        %v1352 = vpop.f32.mrf.mxu0
        %v1353 = vadd.f32 %v1313, %v1352
        %v1354 = vpop.f32.mrf.mxu0
        %v1355 = vpop.f32.mrf.mxu0
        %v1356 = vpop.f32.mrf.mxu0
        %1357 = vdwg.mxu0
        %v1358 = vmax.f32 %v1272, 0.0
        %v1359 = vmax.f32 %v1274, 0.0
        %v1360 = vmax.f32 %v1353, 0.0
        %v1361 = vpack.c.bf16 %v1358, %v1358
        %v1362 = vpack.c.bf16 %v1359, %v1359
        %v1363 = vpack.c.bf16 %v1360, %v1360
        %v1364 = vld [vmem:[%s314] sm:$0xff]
        %v1365 = vld [vmem:[%s314 + $0x8] sm:$0xff]
        %v1366 = vld [vmem:[%s314 + $0x10] sm:$0xff]
        %v1367 = vld [vmem:[%s314 + $0x18] sm:$0xff]
        %v1368 = vld [vmem:[%s314 + $0x20] sm:$0xff]
        %v1369 = vld [vmem:[%s314 + $0x28] sm:$0xff]
        %v1370 = vld [vmem:[%s314 + $0x30] sm:$0xff]
        %v1371 = vld [vmem:[%s314 + $0x38] sm:$0xff]
        %v1372 = vld [vmem:[%s314 + $0x40] sm:$0xff]
        %v1373 = vld [vmem:[%s314 + $0x48] sm:$0xff]
        %v1374 = vld [vmem:[%s314 + $0x50] sm:$0xff]
        %v1375 = vld [vmem:[%s314 + $0x58] sm:$0xff]
        %v1376 = vld [vmem:[%s314 + $0x60] sm:$0xff]
        %v1377 = vld [vmem:[%s314 + $0x68] sm:$0xff]
        %v1378 = vld [vmem:[%s314 + $0x70] sm:$0xff]
        %v1379 = vld [vmem:[%s314 + $0x78] sm:$0xff]
        %v1380 = vld [vmem:[%s314 + $0x80] sm:$0xff]
        %v1381 = vld [vmem:[%s314 + $0x88] sm:$0xff]
        %v1382 = vld [vmem:[%s314 + $0x90] sm:$0xff]
        %v1383 = vld [vmem:[%s314 + $0x98] sm:$0xff]
        %v1384 = vld [vmem:[%s314 + $0xa0] sm:$0xff]
        %v1385 = vld [vmem:[%s314 + $0xa8] sm:$0xff]
        %v1386 = vld [vmem:[%s314 + $0xb0] sm:$0xff]
        %v1387 = vld [vmem:[%s314 + $0xb8] sm:$0xff]
        %v1388 = vld [vmem:[%s314 + $0xc0] sm:$0xff]
        %v1389 = vld [vmem:[%s314 + $0xc8] sm:$0xff]
        %v1390 = vld [vmem:[%s314 + $0xd0] sm:$0xff]
        %v1391 = vld [vmem:[%s314 + $0xd8] sm:$0xff]
        %v1392 = vld [vmem:[%s314 + $0xe0] sm:$0xff]
        %v1393 = vld [vmem:[%s314 + $0xe8] sm:$0xff]
        %v1394 = vld [vmem:[%s314 + $0xf0] sm:$0xff]
        %v1395 = vld [vmem:[%s314 + $0xf8] sm:$0xff]
        %v1396 = vld [vmem:[%s314 + $0x100] sm:$0xff]
        %v1397 = vld [vmem:[%s314 + $0x108] sm:$0xff]
        %v1398 = vld [vmem:[%s314 + $0x110] sm:$0xff]
        %v1399 = vld [vmem:[%s314 + $0x118] sm:$0xff]
        %v1400 = vld [vmem:[%s314 + $0x120] sm:$0xff]
        %v1401 = vld [vmem:[%s314 + $0x128] sm:$0xff]
        %v1402 = vld [vmem:[%s314 + $0x130] sm:$0xff]
        %v1403 = vld [vmem:[%s314 + $0x138] sm:$0xff]
        %v1404 = vld [vmem:[%s314 + $0x140] sm:$0xff]
        %v1405 = vld [vmem:[%s314 + $0x148] sm:$0xff]
        %v1406 = vld [vmem:[%s314 + $0x150] sm:$0xff]
        %v1407 = vld [vmem:[%s314 + $0x158] sm:$0xff]
        %v1408 = vld [vmem:[%s314 + $0x160] sm:$0xff]
        %v1409 = vld [vmem:[%s314 + $0x168] sm:$0xff]
        %v1410 = vld [vmem:[%s314 + $0x170] sm:$0xff]
        %v1411 = vld [vmem:[%s314 + $0x178] sm:$0xff]
        %v1413 = vlaneseq
        %v1414 = vshrl.u32 %v1413, 7
        %v1415 = vsub.s32 0, %v1414
        %v1416 = vrot.slane %v375, %v1415
        %v1417 = vlaneseq
        %v1418 = vshrl.u32 %v1417, 7
        %v1419 = vsub.s32 1, %v1418
        %v1420 = vrot.slane %v375, %v1419
        %v1471 = vunpack.c.l.b16 %v1364
        %v1472 = vunpack.c.h.b16 %v1364
        %v1473 = vunpack.c.l.b16 %v1365
        %v1474 = vunpack.c.h.b16 %v1365
        %v1475 = vunpack.c.l.b16 %v1366
        %v1476 = vunpack.c.h.b16 %v1366
        %v1477 = vunpack.c.l.b16 %v1367
        %v1478 = vunpack.c.h.b16 %v1367
        %v1479 = vunpack.c.l.b16 %v1368
        %v1480 = vunpack.c.h.b16 %v1368
        %v1481 = vunpack.c.l.b16 %v1369
        %v1482 = vunpack.c.h.b16 %v1369
        %v1483 = vunpack.c.l.b16 %v1370
        %v1484 = vunpack.c.h.b16 %v1370
        %v1485 = vunpack.c.l.b16 %v1371
        %v1486 = vunpack.c.h.b16 %v1371
        %v1487 = vunpack.c.l.b16 %v1372
        %v1488 = vunpack.c.h.b16 %v1372
        %v1489 = vunpack.c.l.b16 %v1373
        %v1490 = vunpack.c.h.b16 %v1373
        %v1491 = vunpack.c.l.b16 %v1374
        %v1492 = vunpack.c.h.b16 %v1374
        %v1493 = vunpack.c.l.b16 %v1375
        %v1494 = vunpack.c.h.b16 %v1375
        %v1495 = vunpack.c.l.b16 %v1376
        %v1496 = vunpack.c.h.b16 %v1376
        %v1497 = vunpack.c.l.b16 %v1377
        %v1498 = vunpack.c.h.b16 %v1377
        %v1499 = vunpack.c.l.b16 %v1378
        %v1500 = vunpack.c.h.b16 %v1378
        %v1501 = vunpack.c.l.b16 %v1379
        %v1502 = vunpack.c.h.b16 %v1379
        %v1503 = vunpack.c.l.b16 %v1380
        %v1504 = vunpack.c.h.b16 %v1380
        %v1505 = vunpack.c.l.b16 %v1381
        %v1506 = vunpack.c.h.b16 %v1381
        %v1507 = vunpack.c.l.b16 %v1382
        %v1508 = vunpack.c.h.b16 %v1382
        %v1509 = vunpack.c.l.b16 %v1383
        %v1510 = vunpack.c.h.b16 %v1383
        %v1511 = vunpack.c.l.b16 %v1384
        %v1512 = vunpack.c.h.b16 %v1384
        %v1513 = vunpack.c.l.b16 %v1385
        %v1514 = vunpack.c.h.b16 %v1385
        %v1515 = vunpack.c.l.b16 %v1386
        %v1516 = vunpack.c.h.b16 %v1386
        %v1517 = vunpack.c.l.b16 %v1387
        %v1518 = vunpack.c.h.b16 %v1387
        %v1519 = vunpack.c.l.b16 %v1388
        %v1520 = vunpack.c.h.b16 %v1388
        %v1521 = vunpack.c.l.b16 %v1389
        %v1522 = vunpack.c.h.b16 %v1389
        %v1523 = vunpack.c.l.b16 %v1390
        %v1524 = vunpack.c.h.b16 %v1390
        %v1525 = vunpack.c.l.b16 %v1391
        %v1526 = vunpack.c.h.b16 %v1391
        %v1527 = vunpack.c.l.b16 %v1392
        %v1528 = vunpack.c.h.b16 %v1392
        %v1529 = vunpack.c.l.b16 %v1393
        %v1530 = vunpack.c.h.b16 %v1393
        %v1531 = vunpack.c.l.b16 %v1394
        %v1532 = vunpack.c.h.b16 %v1394
        %v1533 = vunpack.c.l.b16 %v1395
        %v1534 = vunpack.c.h.b16 %v1395
        %v1535 = vunpack.c.l.b16 %v1396
        %v1536 = vunpack.c.h.b16 %v1396
        %v1537 = vunpack.c.l.b16 %v1397
        %v1538 = vunpack.c.h.b16 %v1397
        %v1539 = vunpack.c.l.b16 %v1398
        %v1540 = vunpack.c.h.b16 %v1398
        %v1541 = vunpack.c.l.b16 %v1399
        %v1542 = vunpack.c.h.b16 %v1399
        %v1543 = vunpack.c.l.b16 %v1400
        %v1544 = vunpack.c.h.b16 %v1400
        %v1545 = vunpack.c.l.b16 %v1401
        %v1546 = vunpack.c.h.b16 %v1401
        %v1547 = vunpack.c.l.b16 %v1402
        %v1548 = vunpack.c.h.b16 %v1402
        %v1549 = vunpack.c.l.b16 %v1403
        %v1550 = vunpack.c.h.b16 %v1403
        %v1551 = vunpack.c.l.b16 %v1404
        %v1552 = vunpack.c.h.b16 %v1404
        %v1553 = vunpack.c.l.b16 %v1405
        %v1554 = vunpack.c.h.b16 %v1405
        %v1555 = vunpack.c.l.b16 %v1406
        %v1556 = vunpack.c.h.b16 %v1406
        %v1557 = vunpack.c.l.b16 %v1407
        %v1558 = vunpack.c.h.b16 %v1407
        %v1559 = vunpack.c.l.b16 %v1408
        %v1560 = vunpack.c.h.b16 %v1408
        %v1561 = vunpack.c.l.b16 %v1409
        %v1562 = vunpack.c.h.b16 %v1409
        %v1563 = vunpack.c.l.b16 %v1410
        %v1564 = vunpack.c.h.b16 %v1410
        %v1565 = vunpack.c.l.b16 %v1411
        %v1566 = vunpack.c.h.b16 %v1411
        %v1567 = vpack.c.b16 %v1473, %v1471
        %v1568 = vpack.c.b16 %v1474, %v1472
        %v1569 = vpack.c.b16 %v1477, %v1475
        %v1570 = vpack.c.b16 %v1478, %v1476
        %v1571 = vpack.c.b16 %v1481, %v1479
        %v1572 = vpack.c.b16 %v1482, %v1480
        %v1573 = vpack.c.b16 %v1485, %v1483
        %v1574 = vpack.c.b16 %v1486, %v1484
        %v1575 = vpack.c.b16 %v1489, %v1487
        %v1576 = vpack.c.b16 %v1490, %v1488
        %v1577 = vpack.c.b16 %v1493, %v1491
        %v1578 = vpack.c.b16 %v1494, %v1492
        %v1579 = vpack.c.b16 %v1497, %v1495
        %v1580 = vpack.c.b16 %v1498, %v1496
        %v1581 = vpack.c.b16 %v1501, %v1499
        %v1582 = vpack.c.b16 %v1502, %v1500
        %v1583 = vpack.c.b16 %v1505, %v1503
        %v1584 = vpack.c.b16 %v1506, %v1504
        %v1585 = vpack.c.b16 %v1509, %v1507
        %v1586 = vpack.c.b16 %v1510, %v1508
        %v1587 = vpack.c.b16 %v1513, %v1511
        %v1588 = vpack.c.b16 %v1514, %v1512
        %v1589 = vpack.c.b16 %v1517, %v1515
        %v1590 = vpack.c.b16 %v1518, %v1516
        %v1591 = vpack.c.b16 %v1521, %v1519
        %v1592 = vpack.c.b16 %v1522, %v1520
        %v1593 = vpack.c.b16 %v1525, %v1523
        %v1594 = vpack.c.b16 %v1526, %v1524
        %v1595 = vpack.c.b16 %v1529, %v1527
        %v1596 = vpack.c.b16 %v1530, %v1528
        %v1597 = vpack.c.b16 %v1533, %v1531
        %v1598 = vpack.c.b16 %v1534, %v1532
        %v1599 = vpack.c.b16 %v1537, %v1535
        %v1600 = vpack.c.b16 %v1538, %v1536
        %v1601 = vpack.c.b16 %v1541, %v1539
        %v1602 = vpack.c.b16 %v1542, %v1540
        %v1603 = vpack.c.b16 %v1545, %v1543
        %v1604 = vpack.c.b16 %v1546, %v1544
        %v1605 = vpack.c.b16 %v1549, %v1547
        %v1606 = vpack.c.b16 %v1550, %v1548
        %v1607 = vpack.c.b16 %v1553, %v1551
        %v1608 = vpack.c.b16 %v1554, %v1552
        %v1609 = vpack.c.b16 %v1557, %v1555
        %v1610 = vpack.c.b16 %v1558, %v1556
        %v1611 = vpack.c.b16 %v1561, %v1559
        %v1612 = vpack.c.b16 %v1562, %v1560
        %v1613 = vpack.c.b16 %v1565, %v1563
        %v1614 = vpack.c.b16 %v1566, %v1564
        %1663 = vmatprep.subr.bf16.mxu0 %v1582
        %1664 = vmatpush1.bf16.msra.mxu0 %v1581
        %1665 = vmatprep.subr.bf16.mxu0 %v1580
        %1666 = vmatpush1.bf16.msra.mxu0 %v1579
        %1667 = vmatprep.subr.bf16.mxu0 %v1578
        %1668 = vmatpush1.bf16.msra.mxu0 %v1577
        %1669 = vmatprep.subr.bf16.mxu0 %v1576
        %1670 = vmatpush1.bf16.msra.mxu0 %v1575
        %1671 = vmatprep.subr.bf16.mxu0 %v1574
        %1672 = vmatpush1.bf16.msra.mxu0 %v1573
        %1673 = vmatprep.subr.bf16.mxu0 %v1572
        %1674 = vmatpush1.bf16.msra.mxu0 %v1571
        %1675 = vmatprep.subr.bf16.mxu0 %v1570
        %1676 = vmatpush1.bf16.msra.mxu0 %v1569
        %1677 = vmatprep.subr.bf16.mxu0 %v1568
        %1678 = vmatpush1.bf16.msra.mxu0 %v1567
        %1679 = vmatprep.subr.bf16.mxu0 %v1598
        %1680 = vmatpush2.bf16.msra.mxu0 %v1597
        %1681 = vmatprep.subr.bf16.mxu0 %v1596
        %1682 = vmatpush2.bf16.msra.mxu0 %v1595
        %1683 = vmatprep.subr.bf16.mxu0 %v1594
        %1684 = vmatpush2.bf16.msra.mxu0 %v1593
        %1685 = vmatprep.subr.bf16.mxu0 %v1592
        %1686 = vmatpush2.bf16.msra.mxu0 %v1591
        %1687 = vmatprep.subr.bf16.mxu0 %v1590
        %1688 = vmatpush2.bf16.msra.mxu0 %v1589
        %1689 = vmatprep.subr.bf16.mxu0 %v1588
        %1690 = vmatpush2.bf16.msra.mxu0 %v1587
        %1691 = vmatprep.subr.bf16.mxu0 %v1586
        %1692 = vmatpush2.bf16.msra.mxu0 %v1585
        %1693 = vmatprep.subr.bf16.mxu0 %v1584
        %1694 = vmatpush2.bf16.msra.mxu0 %v1583
        %1695 = vmatprep.mubr.bf16.mxu0 %v1362
        %1696 = vmatmul.mubr.bf16.gmra.mxu0 %v1361
        %v1697 = vpop.f32.mrf.mxu0
        %v1698 = vadd.f32 %v1416, %v1697
        %v1699 = vpop.f32.mrf.mxu0
        %v1700 = vadd.f32 %v1420, %v1699
        %v1701 = vpop.f32.mrf.mxu0
        %v1702 = vpop.f32.mrf.mxu0
        %1703 = vdwg.mxu0
        %1704 = vmatprep.subr.bf16.mxu0 %v1614
        %1705 = vmatpush1.bf16.msra.mxu0 %v1613
        %1706 = vmatprep.subr.bf16.mxu0 %v1612
        %1707 = vmatpush1.bf16.msra.mxu0 %v1611
        %1708 = vmatprep.subr.bf16.mxu0 %v1610
        %1709 = vmatpush1.bf16.msra.mxu0 %v1609
        %1710 = vmatprep.subr.bf16.mxu0 %v1608
        %1711 = vmatpush1.bf16.msra.mxu0 %v1607
        %1712 = vmatprep.subr.bf16.mxu0 %v1606
        %1713 = vmatpush1.bf16.msra.mxu0 %v1605
        %1714 = vmatprep.subr.bf16.mxu0 %v1604
        %1715 = vmatpush1.bf16.msra.mxu0 %v1603
        %1716 = vmatprep.subr.bf16.mxu0 %v1602
        %1717 = vmatpush1.bf16.msra.mxu0 %v1601
        %1718 = vmatprep.subr.bf16.mxu0 %v1600
        %1719 = vmatpush1.bf16.msra.mxu0 %v1599
        %1720 = vmatprep.subr.bf16.mxu0 0
        %1721 = vmatpush2.bf16.msra.mxu0 0
        %1722 = vmatprep.subr.bf16.mxu0 0
        %1723 = vmatpush2.bf16.msra.mxu0 0
        %1724 = vmatprep.subr.bf16.mxu0 0
        %1725 = vmatpush2.bf16.msra.mxu0 0
        %1726 = vmatprep.subr.bf16.mxu0 0
        %1727 = vmatpush2.bf16.msra.mxu0 0
        %1728 = vmatprep.subr.bf16.mxu0 0
        %1729 = vmatpush2.bf16.msra.mxu0 0
        %1730 = vmatprep.subr.bf16.mxu0 0
        %1731 = vmatpush2.bf16.msra.mxu0 0
        %1732 = vmatprep.subr.bf16.mxu0 0
        %1733 = vmatpush2.bf16.msra.mxu0 0
        %1734 = vmatprep.subr.bf16.mxu0 0
        %1735 = vmatpush2.bf16.msra.mxu0 0
        %1736 = vmatprep.mubr.bf16.mxu0 0
        %1737 = vmatmul.mubr.bf16.gmra.mxu0 %v1363
        %v1738 = vpop.f32.mrf.mxu0
        %v1739 = vadd.f32 %v1698, %v1738
        %v1740 = vpop.f32.mrf.mxu0
        %v1741 = vadd.f32 %v1700, %v1740
        %v1742 = vpop.f32.mrf.mxu0
        %v1743 = vpop.f32.mrf.mxu0
        %1744 = vdwg.mxu0
        %1745 = vst [vmem:[%s369] sm:$0xff] %v1739
        %v1746 = vmax.f32 %v1741, -20.0
        %v1747 = vmin.f32 %v1746, 2.0
        %1748 = vst [vmem:[%s369 + $0x8] sm:$0xff] %v1747
        %p1749 = scmp.lt.s32.totalorder %s23, 2
        %s1750 = scalar_select %p1749, %s23, 2
        %s1751 = smul.addr %s1750, 2
        %s1752 = smul.addr %s1751, 8
        %s1753 = scalar_lea.vmem %s5, %s1752
        // Predicated region
        $region61: #{gaussian_policy_forward.1} parent=39 // pred_check
          %p1754 = pneg %p166
        $region62: #{gaussian_policy_forward.1} parent=39 // pred_check_branch
          %1756 = sbr.rel (%p1754) target = $region64
        $region63: #{gaussian_policy_forward.1} parent=39 // pred_region
          _
        $region64: #{gaussian_policy_forward.1} parent=39 // pred_fallthru
          _
      $region40: #{gaussian_policy_forward.1} parent=5 // pred_fallthru
        _
      %p1757 = scmp.le.s32.totalorder 2, %s18
      // Predicated region
      $region65: #{gaussian_policy_forward.1} parent=5 // pred_check
        %p1758 = pneg %p1757
      $region66: #{gaussian_policy_forward.1} parent=5 // pred_check_branch
        %1760 = sbr.rel (%p1758) target = $region68
      $region67: #{gaussian_policy_forward.1} parent=5 // pred_region
        %s1761 = ssub.s32 %s18, 2
        // Predicated region
        $region69: #{gaussian_policy_forward.1} parent=67 // pred_check
          %p1762 = pneg %p172
        $region70: #{gaussian_policy_forward.1} parent=67 // pred_check_branch
          %1764 = sbr.rel (%p1762) target = $region72
        $region71: #{gaussian_policy_forward.1} parent=67 // pred_region
          %p1765 = scmp.lt.s32.totalorder %s24, 2
          %s1766 = scalar_select %p1765, %s24, 2
          %s1767 = smul.addr %s1766, 2
          %s1768 = smul.addr %s1767, 8
          %s1769 = scalar_lea.vmem %s5, %s1768
        $region72: #{gaussian_policy_forward.1} parent=67 // pred_fallthru
          _
      $region68: #{gaussian_policy_forward.1} parent=5 // pred_fallthru
        _
    $region6: #{gaussian_policy_forward.1} parent=1 // loop_footer
      %s22 = sadd.s32 1, %s18
    $region7: #{gaussian_policy_forward.1} parent=1 // loop_footer_branch
      %17 = sbr.rel target = $region3
    $region8: #{gaussian_policy_forward.1} parent=1 // loop_exit
      _
    %1770 = vsyncpa [#allocation3], 1
    %s1771 = scalar_lea.sflag [#allocation3], 1
    %1772 = vsyncpa %s1771, 1
    %1773 = vsyncpa [#allocation5], 1
    %s1774 = scalar_lea.sflag [#allocation5], 1
    %1775 = vsyncpa %s1774, 1
    %1776 = vsyncpa [#allocation8], 1
    %s1777 = scalar_lea.sflag [#allocation8], 1
    %1778 = vsyncpa %s1777, 1

</llo_original>
